<compile_context>
chip_gen: v7x
topology: tpu7x:2x2x1
jax: 0.10.0
libtpu: 0.0.40
codegen_flags: <defaults>
</compile_context>

<pallas_src>
import functools

import jax
import jax.numpy as jnp
from jax.experimental import pallas as pl
from jax.experimental.pallas import tpu as pltpu


# ----------------------------- Fused discriminator kernel -----------------------------
def lstm_discriminator_kernel(
    x_tm_ref,           # (S*B, F_seq)             time-major flattened sequence features
    cond_aug_ref,       # (B, F_cond+1)            [cond | 1]  (ones column carries gate bias)
    x_static_ref,       # (B, S*F_seq+F_cond+1)    [x_flat | cond | 1]  (head "static" inputs)
    wih_seq_t_ref,      # (F_seq, 4H)              g-gate rows pre-scaled by 2
    wih_cond_aug_t_ref, # (F_cond+1, 4H)           [W_ih_cond ; b_ih+b_hh], g rows scaled
    whh_t_ref,          # (H, 4H)                  g rows scaled
    w_head_h_ref,       # (S*H, OUT)               BN-folded head weights for hidden states
    w_head_static_ref,  # (S*F_seq+F_cond+1, OUT)  BN-folded head weights for [x|cond|bias]
    out_ref,            # (B, OUT)
    h_all_ref,          # VMEM scratch (B, S*H): lane-dense hidden-state slab
    *, batch, seq, hidden, out_size,
):
    B, S, H, OUT = batch, seq, hidden, out_size

    # ---- prologue: everything NOT on the serial recurrence path ----
    whh_t = whh_t_ref[...]                                              # (H, 4H)

    # Time-invariant cond projection (+ gate bias via the ones column).
    cond_bias = jnp.dot(cond_aug_ref[...], wih_cond_aug_t_ref[...],
                        preferred_element_type=jnp.float32)             # (B, 4H)

    # Hoisted input projection, with cond_bias folded in ONCE (sublane-aligned
    # concat of S copies) so the time loop has no bias add on the critical path.
    xproj = (jnp.dot(x_tm_ref[...], wih_seq_t_ref[...],
                     preferred_element_type=jnp.float32)
             + jnp.concatenate([cond_bias] * S, axis=0))                # (S*B, 4H)

    # Single fused head contribution of everything independent of h
    # (flattened x, cond summed over seq, linear bias, BN shift).
    head_static = jnp.dot(x_static_ref[...], w_head_static_ref[...],
                          preferred_element_type=jnp.float32)           # (B, OUT)

    # ---- LSTM recurrence: statically unrolled time loop (S is small & static) ----
    h = jnp.zeros((B, H), jnp.float32)
    c = jnp.zeros((B, H), jnp.float32)
    for s in range(S):
        gates = (xproj[s * B:(s + 1) * B, :]
                 + jnp.dot(h, whh_t, preferred_element_type=jnp.float32))   # (B, 4H)
        # ONE whole-vreg sigmoid; g gate recovered via tanh(x) = 2*sigmoid(2x) - 1
        # (g-gate pre-activations were pre-scaled by 2 on the host).
        sig = jax.nn.sigmoid(gates)
        i_g = sig[:, 0:H]
        f_g = sig[:, H:2 * H]
        g_g = 2.0 * sig[:, 2 * H:3 * H] - 1.0
        o_g = sig[:, 3 * H:4 * H]
        c = f_g * c + i_g * g_g
        h = o_g * jnp.tanh(c)
        h_all_ref[:, s * H:(s + 1) * H] = h   # lane-dense slab, stays in VMEM

    # ---- fused flatten + (BN-folded) linear head + output activation ----
    logits = head_static + jnp.dot(h_all_ref[...], w_head_h_ref[...],
                                   preferred_element_type=jnp.float32)  # (B, OUT)
    if OUT > 1:
        out_ref[...] = jax.nn.softmax(logits, axis=-1)
    else:
        out_ref[...] = jax.nn.sigmoid(logits)


def lstm_discriminator_forward(x_seq, cond, kp, *, seq_length, hidden, output_size):
    """x_seq: (B, S, F_seq); cond: (B, F_cond); kp: kernel-layout params."""
    B, S, F_seq = x_seq.shape
    assert S == seq_length
    H, OUT = hidden, output_size

    # Tiny wrapper-side layout ops only (no compute):
    # time-major flatten feeds the hoisted gate projection,
    # batch-major flatten (+cond +ones) feeds the single fused static-head matmul.
    x_tm = jnp.transpose(x_seq, (1, 0, 2)).reshape(S * B, F_seq)
    x_bf = x_seq.reshape(B, S * F_seq)
    ones = jnp.ones((B, 1), jnp.float32)
    cond_aug = jnp.concatenate([cond, ones], axis=1)                    # (B, F_cond+1)
    x_static = jnp.concatenate([x_bf, cond, ones], axis=1)              # (B, S*F_seq+F_cond+1)

    kern = functools.partial(
        lstm_discriminator_kernel, batch=B, seq=S, hidden=H, out_size=OUT)

    n_inputs = 8
    return pl.pallas_call(
        kern,
        out_shape=jax.ShapeDtypeStruct((B, OUT), jnp.float32),
        in_specs=[pl.BlockSpec(memory_space=pltpu.MemorySpace.VMEM)] * n_inputs,
        out_specs=pl.BlockSpec(memory_space=pltpu.MemorySpace.VMEM),
        scratch_shapes=[pltpu.VMEM((B, S * H), jnp.float32)],
    )(x_tm, cond_aug, x_static,
      kp["wih_seq_t"], kp["wih_cond_aug_t"], kp["whh_t"],
      kp["w_head_h"], kp["w_head_static"])


# ----------------------------- Param preprocessing (host-side, once) -----------------------------
def prepare_kernel_params(params, *, seq_length, hidden, f_seq, f_cond, output_size):
    """Fold eval-mode BatchNorm into the head, split W_ih into seq/cond parts,
    fold the gate bias into an augmented cond projection, and pre-scale the g-gate
    pre-activation by 2 so the kernel can use tanh(x) = 2*sigmoid(2x) - 1."""
    H, S, OUT = hidden, seq_length, output_size
    mv = f_seq + f_cond
    w_ih, w_hh = params["w_ih"], params["w_hh"]          # (4H, mv), (4H, H)

    # g-gate (rows 2H:3H, PyTorch order i,f,g,o) pre-activation scaled by 2.
    g_scale = jnp.ones((4 * H,), jnp.float32).at[2 * H:3 * H].set(2.0)
    w_ih_s = w_ih * g_scale[:, None]
    w_hh_s = w_hh * g_scale[:, None]
    b_gates_s = (params["b_ih"] + params["b_hh"]) * g_scale             # (4H,)

    # Eval-mode BN:  y = v * scale + shift  per feature, features ordered [h | x_seq | cond].
    scale = params["bn_gamma"] / jnp.sqrt(params["bn_var"] + params["bn_eps"])
    shift = params["bn_beta"] - params["bn_mean"] * scale

    W3 = params["lin_w"].reshape(OUT, S, H + mv)          # flat index = s*(H+mv) + f
    W_eff = W3 * scale[None, None, :]
    b_eff = params["lin_b"] + jnp.sum(W3 * shift[None, None, :], axis=(1, 2))

    w_head_h = jnp.transpose(W_eff[:, :, :H], (1, 2, 0)).reshape(S * H, OUT)
    w_head_x = jnp.transpose(W_eff[:, :, H:H + f_seq], (1, 2, 0)).reshape(S * f_seq, OUT)
    w_head_c = jnp.sum(W_eff[:, :, H + f_seq:], axis=1).T               # (f_cond, OUT)
    b_head = b_eff.reshape(1, OUT)

    kp = {
        "wih_seq_t": w_ih_s[:, :f_seq].T,                               # (f_seq, 4H)
        # Augmented cond projection: last row is the fused gate bias (hit by the
        # ones column of cond_aug).
        "wih_cond_aug_t": jnp.concatenate(
            [w_ih_s[:, f_seq:].T, b_gates_s.reshape(1, 4 * H)], axis=0),  # (f_cond+1, 4H)
        "whh_t": w_hh_s.T,                                              # (H, 4H)
        "w_head_h": w_head_h,                                           # (S*H, OUT)
        # Single fused static-head weight: rows ordered [x_flat | cond | bias] to
        # match x_static = [x_bf | cond | 1].
        "w_head_static": jnp.concatenate([w_head_x, w_head_c, b_head], axis=0),
    }
    return kp


# ----------------------------- Pure-JAX reference (mirrors the PyTorch module) -----------------------------
def reference_forward(x_seq, cond, params, *, hidden, output_size):
    B, S, F_seq = x_seq.shape
    H = hidden
    cond_rep = jnp.broadcast_to(cond[:, None, :], (B, S, cond.shape[1]))
    lstm_in = jnp.concatenate([x_seq, cond_rep], axis=2)                  # (B, S, mv)
    x_tm = jnp.transpose(lstm_in, (1, 0, 2))                              # (S, B, mv)

    w_ih, w_hh = params["w_ih"], params["w_hh"]
    b = params["b_ih"] + params["b_hh"]

    def step(carry, x_t):
        h, c = carry
        gates = x_t @ w_ih.T + h @ w_hh.T + b
        i = jax.nn.sigmoid(gates[:, 0:H])
        f = jax.nn.sigmoid(gates[:, H:2 * H])
        g = jnp.tanh(gates[:, 2 * H:3 * H])
        o = jax.nn.sigmoid(gates[:, 3 * H:4 * H])
        c_new = f * c + i * g
        h_new = o * jnp.tanh(c_new)
        return (h_new, c_new), h_new

    init = (jnp.zeros((B, H), jnp.float32), jnp.zeros((B, H), jnp.float32))
    _, hs = jax.lax.scan(step, init, x_tm)
    enc = jnp.transpose(hs, (1, 0, 2))                                    # (B, S, H)
    feat = jnp.concatenate([enc, lstm_in], axis=2)                        # (B, S, H+mv)

    scale = params["bn_gamma"] / jnp.sqrt(params["bn_var"] + params["bn_eps"])
    shift = params["bn_beta"] - params["bn_mean"] * scale
    feat = feat * scale + shift                                           # eval-mode BN

    flat = feat.reshape(B, -1)
    logits = flat @ params["lin_w"].T + params["lin_b"]
    if output_size > 1:
        return jax.nn.softmax(logits, axis=1)
    return jax.nn.sigmoid(logits)


# ----------------------------- Param init (deterministic, PyTorch-style layouts) -----------------------------
def init_params(key, *, input_size, hidden, seq_length, output_size):
    H = hidden
    ks = jax.random.split(key, 10)
    bound = 1.0 / (H ** 0.5)
    w_ih = jax.random.uniform(ks[0], (4 * H, input_size), jnp.float32, -bound, bound)
    w_hh = jax.random.uniform(ks[1], (4 * H, H), jnp.float32, -bound, bound)
    b_ih = jax.random.uniform(ks[2], (4 * H,), jnp.float32, -bound, bound)
    b_hh = jax.random.uniform(ks[3], (4 * H,), jnp.float32, -bound, bound)

    feat = H + input_size
    bn_gamma = jax.random.uniform(ks[4], (feat,), jnp.float32, 0.8, 1.2)
    bn_beta = jax.random.uniform(ks[5], (feat,), jnp.float32, -0.1, 0.1)
    bn_mean = 0.1 * jax.random.normal(ks[6], (feat,), jnp.float32)
    bn_var = jax.random.uniform(ks[7], (feat,), jnp.float32, 0.5, 1.5)

    lin_in = feat * seq_length
    lb = 1.0 / (lin_in ** 0.5)
    lin_w = jax.random.uniform(ks[8], (output_size, lin_in), jnp.float32, -lb, lb)
    lin_b = jax.random.uniform(ks[9], (output_size,), jnp.float32, -lb, lb)

    return dict(w_ih=w_ih, w_hh=w_hh, b_ih=b_ih, b_hh=b_hh,
                bn_gamma=bn_gamma, bn_beta=bn_beta, bn_mean=bn_mean, bn_var=bn_var,
                bn_eps=1e-5, lin_w=lin_w, lin_b=lin_b)


if __name__ == "__main__":
    # Small config: batch=8, seq=8, hidden=32, multi_variates=10 (6 sequence + 4 cond
    # features), num_layers=1, output_size=1 -> sigmoid head.
    B, SEQ, H = 8, 8, 32
    F_SEQ, F_COND = 6, 4
    MV = F_SEQ + F_COND          # LSTM input_size == multi_variates
    OUT = 1                      # output_size (== 1 -> sigmoid branch)

    key = jax.random.PRNGKey(0)
    k_x, k_c, k_p = jax.random.split(key, 3)
    x = jax.random.normal(k_x, (B, SEQ, F_SEQ), jnp.float32)
    cond = jax.random.normal(k_c, (B, F_COND), jnp.float32)

    params = init_params(k_p, input_size=MV, hidden=H, seq_length=SEQ, output_size=OUT)
    kp = prepare_kernel_params(params, seq_length=SEQ, hidden=H,
                               f_seq=F_SEQ, f_cond=F_COND, output_size=OUT)

    out = lstm_discriminator_forward(x, cond, kp, seq_length=SEQ, hidden=H,
                                     output_size=OUT)
    out = jax.block_until_ready(out)

    ref = reference_forward(x, cond, params, hidden=H, output_size=OUT)
    ref = jax.block_until_ready(ref)

    assert out.shape == (B, OUT), out.shape
    max_err = float(jnp.max(jnp.abs(out - ref)))
    assert jnp.allclose(out, ref, atol=2e-5, rtol=2e-5), max_err
    print("KERNEL_OK")
</pallas_src>

<mosaic_0001>
module attributes {stable_mosaic.version = 11 : i64} {
  func.func @lstm_discriminator_kernel(%arg0: memref<64x6xf32, #tpu.memory_space<vmem>>, %arg1: memref<8x5xf32, #tpu.memory_space<vmem>>, %arg2: memref<8x53xf32, #tpu.memory_space<vmem>>, %arg3: memref<6x128xf32, #tpu.memory_space<vmem>>, %arg4: memref<5x128xf32, #tpu.memory_space<vmem>>, %arg5: memref<32x128xf32, #tpu.memory_space<vmem>>, %arg6: memref<256x1xf32, #tpu.memory_space<vmem>>, %arg7: memref<53x1xf32, #tpu.memory_space<vmem>>, %arg8: memref<8x1xf32, #tpu.memory_space<vmem>>, %arg9: memref<8x256xf32, #tpu.memory_space<vmem>>) attributes {dimension_semantics = [], scalar_prefetch = 0 : i64, scratch_operands = 1 : i64, tpu.core_type = #tpu.core_type<tc>} {
    %c0 = arith.constant 0 : index
    %c0_0 = arith.constant 0 : index
    %0 = vector.load %arg5[%c0, %c0_0] : memref<32x128xf32, #tpu.memory_space<vmem>>, vector<32x128xf32>
    %c0_1 = arith.constant 0 : index
    %c0_2 = arith.constant 0 : index
    %1 = vector.load %arg1[%c0_1, %c0_2] : memref<8x5xf32, #tpu.memory_space<vmem>>, vector<8x5xf32>
    %c0_3 = arith.constant 0 : index
    %c0_4 = arith.constant 0 : index
    %2 = vector.load %arg4[%c0_3, %c0_4] : memref<5x128xf32, #tpu.memory_space<vmem>>, vector<5x128xf32>
    %cst = arith.constant dense<0.000000e+00> : vector<8x128xf32>
    %3 = tpu.matmul %1, %2, %cst {dimension_numbers = #tpu.dot_dimension_numbers<[1], [0], [0], [1], [0, 0, 1, 1], [], []>} : vector<8x5xf32>, vector<5x128xf32>, vector<8x128xf32> -> vector<8x128xf32>
    %c0_5 = arith.constant 0 : index
    %c0_6 = arith.constant 0 : index
    %4 = vector.load %arg0[%c0_5, %c0_6] : memref<64x6xf32, #tpu.memory_space<vmem>>, vector<64x6xf32>
    %c0_7 = arith.constant 0 : index
    %c0_8 = arith.constant 0 : index
    %5 = vector.load %arg3[%c0_7, %c0_8] : memref<6x128xf32, #tpu.memory_space<vmem>>, vector<6x128xf32>
    %cst_9 = arith.constant dense<0.000000e+00> : vector<64x128xf32>
    %6 = tpu.matmul %4, %5, %cst_9 {dimension_numbers = #tpu.dot_dimension_numbers<[1], [0], [0], [1], [0, 0, 1, 1], [], []>} : vector<64x6xf32>, vector<6x128xf32>, vector<64x128xf32> -> vector<64x128xf32>
    %7 = tpu.concatenate %3, %3, %3, %3, %3, %3, %3, %3 in 0 : vector<8x128xf32>, vector<8x128xf32>, vector<8x128xf32>, vector<8x128xf32>, vector<8x128xf32>, vector<8x128xf32>, vector<8x128xf32>, vector<8x128xf32> -> vector<64x128xf32>
    %8 = arith.addf %6, %7 : vector<64x128xf32>
    %c0_10 = arith.constant 0 : index
    %c0_11 = arith.constant 0 : index
    %9 = vector.load %arg2[%c0_10, %c0_11] : memref<8x53xf32, #tpu.memory_space<vmem>>, vector<8x53xf32>
    %c0_12 = arith.constant 0 : index
    %c0_13 = arith.constant 0 : index
    %10 = vector.load %arg7[%c0_12, %c0_13] : memref<53x1xf32, #tpu.memory_space<vmem>>, vector<53x1xf32>
    %cst_14 = arith.constant dense<0.000000e+00> : vector<8x1xf32>
    %11 = tpu.matmul %9, %10, %cst_14 {dimension_numbers = #tpu.dot_dimension_numbers<[1], [0], [0], [1], [0, 0, 1, 1], [], []>} : vector<8x53xf32>, vector<53x1xf32>, vector<8x1xf32> -> vector<8x1xf32>
    %cst_15 = arith.constant 0.000000e+00 : f32
    %12 = vector.broadcast %cst_15 : f32 to vector<8x32xf32>
    %cst_16 = arith.constant 0.000000e+00 : f32
    %13 = vector.broadcast %cst_16 : f32 to vector<8x32xf32>
    %14 = vector.extract_strided_slice %8 {offsets = [0, 0], sizes = [8, 128], strides = [1, 1]} : vector<64x128xf32> to vector<8x128xf32>
    %cst_17 = arith.constant dense<0.000000e+00> : vector<8x128xf32>
    %15 = tpu.matmul %12, %0, %cst_17 {dimension_numbers = #tpu.dot_dimension_numbers<[1], [0], [0], [1], [0, 0, 1, 1], [], []>} : vector<8x32xf32>, vector<32x128xf32>, vector<8x128xf32> -> vector<8x128xf32>
    %16 = arith.addf %14, %15 : vector<8x128xf32>
    %17 = arith.negf %16 : vector<8x128xf32>
    %18 = math.exp %17 : vector<8x128xf32>
    %cst_18 = arith.constant 1.000000e+00 : f32
    %19 = vector.broadcast %cst_18 : f32 to vector<8x128xf32>
    %20 = arith.addf %19, %18 : vector<8x128xf32>
    %21 = arith.divf %19, %20 : vector<8x128xf32>
    %22 = vector.extract_strided_slice %21 {offsets = [0, 0], sizes = [8, 32], strides = [1, 1]} : vector<8x128xf32> to vector<8x32xf32>
    %23 = vector.extract_strided_slice %21 {offsets = [0, 32], sizes = [8, 32], strides = [1, 1]} : vector<8x128xf32> to vector<8x32xf32>
    %24 = vector.extract_strided_slice %21 {offsets = [0, 64], sizes = [8, 32], strides = [1, 1]} : vector<8x128xf32> to vector<8x32xf32>
    %cst_19 = arith.constant 2.000000e+00 : f32
    %25 = vector.broadcast %cst_19 : f32 to vector<8x32xf32>
    %26 = arith.mulf %25, %24 : vector<8x32xf32>
    %cst_20 = arith.constant 1.000000e+00 : f32
    %27 = vector.broadcast %cst_20 : f32 to vector<8x32xf32>
    %28 = arith.subf %26, %27 : vector<8x32xf32>
    %29 = vector.extract_strided_slice %21 {offsets = [0, 96], sizes = [8, 32], strides = [1, 1]} : vector<8x128xf32> to vector<8x32xf32>
    %30 = arith.mulf %23, %13 : vector<8x32xf32>
    %31 = arith.mulf %22, %28 : vector<8x32xf32>
    %32 = arith.addf %30, %31 : vector<8x32xf32>
    %33 = math.tanh %32 : vector<8x32xf32>
    %34 = arith.mulf %29, %33 : vector<8x32xf32>
    %c0_21 = arith.constant 0 : index
    %c0_22 = arith.constant 0 : index
    %35 = vector.load %arg9[%c0_21, %c0_22] : memref<8x256xf32, #tpu.memory_space<vmem>>, vector<8x32xf32>
    tpu.vector_store %arg9[%c0_21, %c0_22], %34 {strides = array<i32>} : memref<8x256xf32, #tpu.memory_space<vmem>>, vector<8x32xf32>,
    %36 = vector.extract_strided_slice %8 {offsets = [8, 0], sizes = [8, 128], strides = [1, 1]} : vector<64x128xf32> to vector<8x128xf32>
    %cst_23 = arith.constant dense<0.000000e+00> : vector<8x128xf32>
    %37 = tpu.matmul %34, %0, %cst_23 {dimension_numbers = #tpu.dot_dimension_numbers<[1], [0], [0], [1], [0, 0, 1, 1], [], []>} : vector<8x32xf32>, vector<32x128xf32>, vector<8x128xf32> -> vector<8x128xf32>
    %38 = arith.addf %36, %37 : vector<8x128xf32>
    %39 = arith.negf %38 : vector<8x128xf32>
    %40 = math.exp %39 : vector<8x128xf32>
    %cst_24 = arith.constant 1.000000e+00 : f32
    %41 = vector.broadcast %cst_24 : f32 to vector<8x128xf32>
    %42 = arith.addf %41, %40 : vector<8x128xf32>
    %43 = arith.divf %41, %42 : vector<8x128xf32>
    %44 = vector.extract_strided_slice %43 {offsets = [0, 0], sizes = [8, 32], strides = [1, 1]} : vector<8x128xf32> to vector<8x32xf32>
    %45 = vector.extract_strided_slice %43 {offsets = [0, 32], sizes = [8, 32], strides = [1, 1]} : vector<8x128xf32> to vector<8x32xf32>
    %46 = vector.extract_strided_slice %43 {offsets = [0, 64], sizes = [8, 32], strides = [1, 1]} : vector<8x128xf32> to vector<8x32xf32>
    %cst_25 = arith.constant 2.000000e+00 : f32
    %47 = vector.broadcast %cst_25 : f32 to vector<8x32xf32>
    %48 = arith.mulf %47, %46 : vector<8x32xf32>
    %cst_26 = arith.constant 1.000000e+00 : f32
    %49 = vector.broadcast %cst_26 : f32 to vector<8x32xf32>
    %50 = arith.subf %48, %49 : vector<8x32xf32>
    %51 = vector.extract_strided_slice %43 {offsets = [0, 96], sizes = [8, 32], strides = [1, 1]} : vector<8x128xf32> to vector<8x32xf32>
    %52 = arith.mulf %45, %32 : vector<8x32xf32>
    %53 = arith.mulf %44, %50 : vector<8x32xf32>
    %54 = arith.addf %52, %53 : vector<8x32xf32>
    %55 = math.tanh %54 : vector<8x32xf32>
    %56 = arith.mulf %51, %55 : vector<8x32xf32>
    %c0_27 = arith.constant 0 : index
    %c32 = arith.constant 32 : index
    %57 = vector.load %arg9[%c0_27, %c32] : memref<8x256xf32, #tpu.memory_space<vmem>>, vector<8x32xf32>
    tpu.vector_store %arg9[%c0_27, %c32], %56 {strides = array<i32>} : memref<8x256xf32, #tpu.memory_space<vmem>>, vector<8x32xf32>,
    %58 = vector.extract_strided_slice %8 {offsets = [16, 0], sizes = [8, 128], strides = [1, 1]} : vector<64x128xf32> to vector<8x128xf32>
    %cst_28 = arith.constant dense<0.000000e+00> : vector<8x128xf32>
    %59 = tpu.matmul %56, %0, %cst_28 {dimension_numbers = #tpu.dot_dimension_numbers<[1], [0], [0], [1], [0, 0, 1, 1], [], []>} : vector<8x32xf32>, vector<32x128xf32>, vector<8x128xf32> -> vector<8x128xf32>
    %60 = arith.addf %58, %59 : vector<8x128xf32>
    %61 = arith.negf %60 : vector<8x128xf32>
    %62 = math.exp %61 : vector<8x128xf32>
    %cst_29 = arith.constant 1.000000e+00 : f32
    %63 = vector.broadcast %cst_29 : f32 to vector<8x128xf32>
    %64 = arith.addf %63, %62 : vector<8x128xf32>
    %65 = arith.divf %63, %64 : vector<8x128xf32>
    %66 = vector.extract_strided_slice %65 {offsets = [0, 0], sizes = [8, 32], strides = [1, 1]} : vector<8x128xf32> to vector<8x32xf32>
    %67 = vector.extract_strided_slice %65 {offsets = [0, 32], sizes = [8, 32], strides = [1, 1]} : vector<8x128xf32> to vector<8x32xf32>
    %68 = vector.extract_strided_slice %65 {offsets = [0, 64], sizes = [8, 32], strides = [1, 1]} : vector<8x128xf32> to vector<8x32xf32>
    %cst_30 = arith.constant 2.000000e+00 : f32
    %69 = vector.broadcast %cst_30 : f32 to vector<8x32xf32>
    %70 = arith.mulf %69, %68 : vector<8x32xf32>
    %cst_31 = arith.constant 1.000000e+00 : f32
    %71 = vector.broadcast %cst_31 : f32 to vector<8x32xf32>
    %72 = arith.subf %70, %71 : vector<8x32xf32>
    %73 = vector.extract_strided_slice %65 {offsets = [0, 96], sizes = [8, 32], strides = [1, 1]} : vector<8x128xf32> to vector<8x32xf32>
    %74 = arith.mulf %67, %54 : vector<8x32xf32>
    %75 = arith.mulf %66, %72 : vector<8x32xf32>
    %76 = arith.addf %74, %75 : vector<8x32xf32>
    %77 = math.tanh %76 : vector<8x32xf32>
    %78 = arith.mulf %73, %77 : vector<8x32xf32>
    %c0_32 = arith.constant 0 : index
    %c64 = arith.constant 64 : index
    %79 = vector.load %arg9[%c0_32, %c64] : memref<8x256xf32, #tpu.memory_space<vmem>>, vector<8x32xf32>
    tpu.vector_store %arg9[%c0_32, %c64], %78 {strides = array<i32>} : memref<8x256xf32, #tpu.memory_space<vmem>>, vector<8x32xf32>,
    %80 = vector.extract_strided_slice %8 {offsets = [24, 0], sizes = [8, 128], strides = [1, 1]} : vector<64x128xf32> to vector<8x128xf32>
    %cst_33 = arith.constant dense<0.000000e+00> : vector<8x128xf32>
    %81 = tpu.matmul %78, %0, %cst_33 {dimension_numbers = #tpu.dot_dimension_numbers<[1], [0], [0], [1], [0, 0, 1, 1], [], []>} : vector<8x32xf32>, vector<32x128xf32>, vector<8x128xf32> -> vector<8x128xf32>
    %82 = arith.addf %80, %81 : vector<8x128xf32>
    %83 = arith.negf %82 : vector<8x128xf32>
    %84 = math.exp %83 : vector<8x128xf32>
    %cst_34 = arith.constant 1.000000e+00 : f32
    %85 = vector.broadcast %cst_34 : f32 to vector<8x128xf32>
    %86 = arith.addf %85, %84 : vector<8x128xf32>
    %87 = arith.divf %85, %86 : vector<8x128xf32>
    %88 = vector.extract_strided_slice %87 {offsets = [0, 0], sizes = [8, 32], strides = [1, 1]} : vector<8x128xf32> to vector<8x32xf32>
    %89 = vector.extract_strided_slice %87 {offsets = [0, 32], sizes = [8, 32], strides = [1, 1]} : vector<8x128xf32> to vector<8x32xf32>
    %90 = vector.extract_strided_slice %87 {offsets = [0, 64], sizes = [8, 32], strides = [1, 1]} : vector<8x128xf32> to vector<8x32xf32>
    %cst_35 = arith.constant 2.000000e+00 : f32
    %91 = vector.broadcast %cst_35 : f32 to vector<8x32xf32>
    %92 = arith.mulf %91, %90 : vector<8x32xf32>
    %cst_36 = arith.constant 1.000000e+00 : f32
    %93 = vector.broadcast %cst_36 : f32 to vector<8x32xf32>
    %94 = arith.subf %92, %93 : vector<8x32xf32>
    %95 = vector.extract_strided_slice %87 {offsets = [0, 96], sizes = [8, 32], strides = [1, 1]} : vector<8x128xf32> to vector<8x32xf32>
    %96 = arith.mulf %89, %76 : vector<8x32xf32>
    %97 = arith.mulf %88, %94 : vector<8x32xf32>
    %98 = arith.addf %96, %97 : vector<8x32xf32>
    %99 = math.tanh %98 : vector<8x32xf32>
    %100 = arith.mulf %95, %99 : vector<8x32xf32>
    %c0_37 = arith.constant 0 : index
    %c96 = arith.constant 96 : index
    %101 = vector.load %arg9[%c0_37, %c96] : memref<8x256xf32, #tpu.memory_space<vmem>>, vector<8x32xf32>
    tpu.vector_store %arg9[%c0_37, %c96], %100 {strides = array<i32>} : memref<8x256xf32, #tpu.memory_space<vmem>>, vector<8x32xf32>,
    %102 = vector.extract_strided_slice %8 {offsets = [32, 0], sizes = [8, 128], strides = [1, 1]} : vector<64x128xf32> to vector<8x128xf32>
    %cst_38 = arith.constant dense<0.000000e+00> : vector<8x128xf32>
    %103 = tpu.matmul %100, %0, %cst_38 {dimension_numbers = #tpu.dot_dimension_numbers<[1], [0], [0], [1], [0, 0, 1, 1], [], []>} : vector<8x32xf32>, vector<32x128xf32>, vector<8x128xf32> -> vector<8x128xf32>
    %104 = arith.addf %102, %103 : vector<8x128xf32>
    %105 = arith.negf %104 : vector<8x128xf32>
    %106 = math.exp %105 : vector<8x128xf32>
    %cst_39 = arith.constant 1.000000e+00 : f32
    %107 = vector.broadcast %cst_39 : f32 to vector<8x128xf32>
    %108 = arith.addf %107, %106 : vector<8x128xf32>
    %109 = arith.divf %107, %108 : vector<8x128xf32>
    %110 = vector.extract_strided_slice %109 {offsets = [0, 0], sizes = [8, 32], strides = [1, 1]} : vector<8x128xf32> to vector<8x32xf32>
    %111 = vector.extract_strided_slice %109 {offsets = [0, 32], sizes = [8, 32], strides = [1, 1]} : vector<8x128xf32> to vector<8x32xf32>
    %112 = vector.extract_strided_slice %109 {offsets = [0, 64], sizes = [8, 32], strides = [1, 1]} : vector<8x128xf32> to vector<8x32xf32>
    %cst_40 = arith.constant 2.000000e+00 : f32
    %113 = vector.broadcast %cst_40 : f32 to vector<8x32xf32>
    %114 = arith.mulf %113, %112 : vector<8x32xf32>
    %cst_41 = arith.constant 1.000000e+00 : f32
    %115 = vector.broadcast %cst_41 : f32 to vector<8x32xf32>
    %116 = arith.subf %114, %115 : vector<8x32xf32>
    %117 = vector.extract_strided_slice %109 {offsets = [0, 96], sizes = [8, 32], strides = [1, 1]} : vector<8x128xf32> to vector<8x32xf32>
    %118 = arith.mulf %111, %98 : vector<8x32xf32>
    %119 = arith.mulf %110, %116 : vector<8x32xf32>
    %120 = arith.addf %118, %119 : vector<8x32xf32>
    %121 = math.tanh %120 : vector<8x32xf32>
    %122 = arith.mulf %117, %121 : vector<8x32xf32>
    %c0_42 = arith.constant 0 : index
    %c128 = arith.constant 128 : index
    %123 = vector.load %arg9[%c0_42, %c128] : memref<8x256xf32, #tpu.memory_space<vmem>>, vector<8x32xf32>
    tpu.vector_store %arg9[%c0_42, %c128], %122 {strides = array<i32>} : memref<8x256xf32, #tpu.memory_space<vmem>>, vector<8x32xf32>,
    %124 = vector.extract_strided_slice %8 {offsets = [40, 0], sizes = [8, 128], strides = [1, 1]} : vector<64x128xf32> to vector<8x128xf32>
    %cst_43 = arith.constant dense<0.000000e+00> : vector<8x128xf32>
    %125 = tpu.matmul %122, %0, %cst_43 {dimension_numbers = #tpu.dot_dimension_numbers<[1], [0], [0], [1], [0, 0, 1, 1], [], []>} : vector<8x32xf32>, vector<32x128xf32>, vector<8x128xf32> -> vector<8x128xf32>
    %126 = arith.addf %124, %125 : vector<8x128xf32>
    %127 = arith.negf %126 : vector<8x128xf32>
    %128 = math.exp %127 : vector<8x128xf32>
    %cst_44 = arith.constant 1.000000e+00 : f32
    %129 = vector.broadcast %cst_44 : f32 to vector<8x128xf32>
    %130 = arith.addf %129, %128 : vector<8x128xf32>
    %131 = arith.divf %129, %130 : vector<8x128xf32>
    %132 = vector.extract_strided_slice %131 {offsets = [0, 0], sizes = [8, 32], strides = [1, 1]} : vector<8x128xf32> to vector<8x32xf32>
    %133 = vector.extract_strided_slice %131 {offsets = [0, 32], sizes = [8, 32], strides = [1, 1]} : vector<8x128xf32> to vector<8x32xf32>
    %134 = vector.extract_strided_slice %131 {offsets = [0, 64], sizes = [8, 32], strides = [1, 1]} : vector<8x128xf32> to vector<8x32xf32>
    %cst_45 = arith.constant 2.000000e+00 : f32
    %135 = vector.broadcast %cst_45 : f32 to vector<8x32xf32>
    %136 = arith.mulf %135, %134 : vector<8x32xf32>
    %cst_46 = arith.constant 1.000000e+00 : f32
    %137 = vector.broadcast %cst_46 : f32 to vector<8x32xf32>
    %138 = arith.subf %136, %137 : vector<8x32xf32>
    %139 = vector.extract_strided_slice %131 {offsets = [0, 96], sizes = [8, 32], strides = [1, 1]} : vector<8x128xf32> to vector<8x32xf32>
    %140 = arith.mulf %133, %120 : vector<8x32xf32>
    %141 = arith.mulf %132, %138 : vector<8x32xf32>
    %142 = arith.addf %140, %141 : vector<8x32xf32>
    %143 = math.tanh %142 : vector<8x32xf32>
    %144 = arith.mulf %139, %143 : vector<8x32xf32>
    %c0_47 = arith.constant 0 : index
    %c160 = arith.constant 160 : index
    %145 = vector.load %arg9[%c0_47, %c160] : memref<8x256xf32, #tpu.memory_space<vmem>>, vector<8x32xf32>
    tpu.vector_store %arg9[%c0_47, %c160], %144 {strides = array<i32>} : memref<8x256xf32, #tpu.memory_space<vmem>>, vector<8x32xf32>,
    %146 = vector.extract_strided_slice %8 {offsets = [48, 0], sizes = [8, 128], strides = [1, 1]} : vector<64x128xf32> to vector<8x128xf32>
    %cst_48 = arith.constant dense<0.000000e+00> : vector<8x128xf32>
    %147 = tpu.matmul %144, %0, %cst_48 {dimension_numbers = #tpu.dot_dimension_numbers<[1], [0], [0], [1], [0, 0, 1, 1], [], []>} : vector<8x32xf32>, vector<32x128xf32>, vector<8x128xf32> -> vector<8x128xf32>
    %148 = arith.addf %146, %147 : vector<8x128xf32>
    %149 = arith.negf %148 : vector<8x128xf32>
    %150 = math.exp %149 : vector<8x128xf32>
    %cst_49 = arith.constant 1.000000e+00 : f32
    %151 = vector.broadcast %cst_49 : f32 to vector<8x128xf32>
    %152 = arith.addf %151, %150 : vector<8x128xf32>
    %153 = arith.divf %151, %152 : vector<8x128xf32>
    %154 = vector.extract_strided_slice %153 {offsets = [0, 0], sizes = [8, 32], strides = [1, 1]} : vector<8x128xf32> to vector<8x32xf32>
    %155 = vector.extract_strided_slice %153 {offsets = [0, 32], sizes = [8, 32], strides = [1, 1]} : vector<8x128xf32> to vector<8x32xf32>
    %156 = vector.extract_strided_slice %153 {offsets = [0, 64], sizes = [8, 32], strides = [1, 1]} : vector<8x128xf32> to vector<8x32xf32>
    %cst_50 = arith.constant 2.000000e+00 : f32
    %157 = vector.broadcast %cst_50 : f32 to vector<8x32xf32>
    %158 = arith.mulf %157, %156 : vector<8x32xf32>
    %cst_51 = arith.constant 1.000000e+00 : f32
    %159 = vector.broadcast %cst_51 : f32 to vector<8x32xf32>
    %160 = arith.subf %158, %159 : vector<8x32xf32>
    %161 = vector.extract_strided_slice %153 {offsets = [0, 96], sizes = [8, 32], strides = [1, 1]} : vector<8x128xf32> to vector<8x32xf32>
    %162 = arith.mulf %155, %142 : vector<8x32xf32>
    %163 = arith.mulf %154, %160 : vector<8x32xf32>
    %164 = arith.addf %162, %163 : vector<8x32xf32>
    %165 = math.tanh %164 : vector<8x32xf32>
    %166 = arith.mulf %161, %165 : vector<8x32xf32>
    %c0_52 = arith.constant 0 : index
    %c192 = arith.constant 192 : index
    %167 = vector.load %arg9[%c0_52, %c192] : memref<8x256xf32, #tpu.memory_space<vmem>>, vector<8x32xf32>
    tpu.vector_store %arg9[%c0_52, %c192], %166 {strides = array<i32>} : memref<8x256xf32, #tpu.memory_space<vmem>>, vector<8x32xf32>,
    %168 = vector.extract_strided_slice %8 {offsets = [56, 0], sizes = [8, 128], strides = [1, 1]} : vector<64x128xf32> to vector<8x128xf32>
    %cst_53 = arith.constant dense<0.000000e+00> : vector<8x128xf32>
    %169 = tpu.matmul %166, %0, %cst_53 {dimension_numbers = #tpu.dot_dimension_numbers<[1], [0], [0], [1], [0, 0, 1, 1], [], []>} : vector<8x32xf32>, vector<32x128xf32>, vector<8x128xf32> -> vector<8x128xf32>
    %170 = arith.addf %168, %169 : vector<8x128xf32>
    %171 = arith.negf %170 : vector<8x128xf32>
    %172 = math.exp %171 : vector<8x128xf32>
    %cst_54 = arith.constant 1.000000e+00 : f32
    %173 = vector.broadcast %cst_54 : f32 to vector<8x128xf32>
    %174 = arith.addf %173, %172 : vector<8x128xf32>
    %175 = arith.divf %173, %174 : vector<8x128xf32>
    %176 = vector.extract_strided_slice %175 {offsets = [0, 0], sizes = [8, 32], strides = [1, 1]} : vector<8x128xf32> to vector<8x32xf32>
    %177 = vector.extract_strided_slice %175 {offsets = [0, 32], sizes = [8, 32], strides = [1, 1]} : vector<8x128xf32> to vector<8x32xf32>
    %178 = vector.extract_strided_slice %175 {offsets = [0, 64], sizes = [8, 32], strides = [1, 1]} : vector<8x128xf32> to vector<8x32xf32>
    %cst_55 = arith.constant 2.000000e+00 : f32
    %179 = vector.broadcast %cst_55 : f32 to vector<8x32xf32>
    %180 = arith.mulf %179, %178 : vector<8x32xf32>
    %cst_56 = arith.constant 1.000000e+00 : f32
    %181 = vector.broadcast %cst_56 : f32 to vector<8x32xf32>
    %182 = arith.subf %180, %181 : vector<8x32xf32>
    %183 = vector.extract_strided_slice %175 {offsets = [0, 96], sizes = [8, 32], strides = [1, 1]} : vector<8x128xf32> to vector<8x32xf32>
    %184 = arith.mulf %177, %164 : vector<8x32xf32>
    %185 = arith.mulf %176, %182 : vector<8x32xf32>
    %186 = arith.addf %184, %185 : vector<8x32xf32>
    %187 = math.tanh %186 : vector<8x32xf32>
    %188 = arith.mulf %183, %187 : vector<8x32xf32>
    %c0_57 = arith.constant 0 : index
    %c224 = arith.constant 224 : index
    %189 = vector.load %arg9[%c0_57, %c224] : memref<8x256xf32, #tpu.memory_space<vmem>>, vector<8x32xf32>
    tpu.vector_store %arg9[%c0_57, %c224], %188 {strides = array<i32>} : memref<8x256xf32, #tpu.memory_space<vmem>>, vector<8x32xf32>,
    %c0_58 = arith.constant 0 : index
    %c0_59 = arith.constant 0 : index
    %190 = vector.load %arg9[%c0_58, %c0_59] : memref<8x256xf32, #tpu.memory_space<vmem>>, vector<8x256xf32>
    %c0_60 = arith.constant 0 : index
    %c0_61 = arith.constant 0 : index
    %191 = vector.load %arg6[%c0_60, %c0_61] : memref<256x1xf32, #tpu.memory_space<vmem>>, vector<256x1xf32>
    %cst_62 = arith.constant dense<0.000000e+00> : vector<8x1xf32>
    %192 = tpu.matmul %190, %191, %cst_62 {dimension_numbers = #tpu.dot_dimension_numbers<[1], [0], [0], [1], [0, 0, 1, 1], [], []>} : vector<8x256xf32>, vector<256x1xf32>, vector<8x1xf32> -> vector<8x1xf32>
    %193 = arith.addf %11, %192 : vector<8x1xf32>
    %194 = arith.negf %193 : vector<8x1xf32>
    %195 = math.exp %194 : vector<8x1xf32>
    %cst_63 = arith.constant 1.000000e+00 : f32
    %196 = vector.broadcast %cst_63 : f32 to vector<8x1xf32>
    %197 = arith.addf %196, %195 : vector<8x1xf32>
    %198 = arith.divf %196, %197 : vector<8x1xf32>
    %c0_64 = arith.constant 0 : index
    %c0_65 = arith.constant 0 : index
    %199 = vector.load %arg8[%c0_64, %c0_65] : memref<8x1xf32, #tpu.memory_space<vmem>>, vector<8x1xf32>
    tpu.vector_store %arg8[%c0_64, %c0_65], %198 {strides = array<i32>} : memref<8x1xf32, #tpu.memory_space<vmem>>, vector<8x1xf32>,
    return
  }
}

</mosaic_0001>

<llo_original>
// kernel: tpu_custom_call.1
$region0: #{tpu_custom_call.1}
  #allocation0 [shape = 'u32[]', space=smem, size = 0x4, offset = 0x4, fixed_abs, tag = 'smem constant byte address 0x4 - core index']
  #allocation1 [shape = 'u32[144,128]{1,0:T(1,128)}', space=vmem, size = 0x12000, scoped, tag = 'internal scratch']
  #allocation2 [shape = 'f32[8,256]{1,0:T(8,128)}', space=vmem, size = 0x2000, scoped, tag = 'scratch operand']
  %s0 = inlined_call_operand.vmem [shape: f32[64,6], index: 0, kind: input, shape index: {}]
  %s1 = inlined_call_operand.vmem [shape: f32[8,5], index: 1, kind: input, shape index: {}]
  %s2 = inlined_call_operand.vmem [shape: f32[8,53], index: 2, kind: input, shape index: {}]
  %s3 = inlined_call_operand.vmem [shape: f32[6,128], index: 3, kind: input, shape index: {}]
  %s4 = inlined_call_operand.vmem [shape: f32[5,128], index: 4, kind: input, shape index: {}]
  %s5 = inlined_call_operand.vmem [shape: f32[32,128], index: 5, kind: input, shape index: {}]
  %s6 = inlined_call_operand.vmem [shape: f32[256,1], index: 6, kind: input, shape index: {}]
  %s7 = inlined_call_operand.vmem [shape: f32[53,1], index: 7, kind: input, shape index: {}]
  %s8 = inlined_call_operand.vmem [shape: f32[8,1], index: 8, kind: output, shape index: {}]
  %s9 = sld [smem:[#allocation0]]
  $region42: #{tpu_custom_call.1} parent=0
    _
  %s11 = ssub.s32 1, %s9
  %s12 = scalar_select 0, %s11, %s9
  // Predicated region
  $region2: #{tpu_custom_call.1} parent=0 // pred_check
    _
  $region3: #{tpu_custom_call.1} parent=0 // pred_check_branch
    %14 = sbr.rel (0) target = $region5
  $region4: #{tpu_custom_call.1} parent=0 // pred_region
    _
  $region5: #{tpu_custom_call.1} parent=0 // pred_fallthru
    _
  // Predicated region
  $region6: #{tpu_custom_call.1} parent=0 // pred_check
    _
  $region7: #{tpu_custom_call.1} parent=0 // pred_check_branch
    %16 = sbr.rel (0) target = $region9
  $region8: #{tpu_custom_call.1} parent=0 // pred_region
    _
  $region9: #{tpu_custom_call.1} parent=0 // pred_fallthru
    _
  // Predicated region
  $region10: #{tpu_custom_call.1} parent=0 // pred_check
    _
  $region11: #{tpu_custom_call.1} parent=0 // pred_check_branch
    %18 = sbr.rel (0) target = $region13
  $region12: #{tpu_custom_call.1} parent=0 // pred_region
    _
  $region13: #{tpu_custom_call.1} parent=0 // pred_fallthru
    _
  // Predicated region
  $region14: #{tpu_custom_call.1} parent=0 // pred_check
    _
  $region15: #{tpu_custom_call.1} parent=0 // pred_check_branch
    %20 = sbr.rel (0) target = $region17
  $region16: #{tpu_custom_call.1} parent=0 // pred_region
    _
  $region17: #{tpu_custom_call.1} parent=0 // pred_fallthru
    _
  // Predicated region
  $region18: #{tpu_custom_call.1} parent=0 // pred_check
    _
  $region19: #{tpu_custom_call.1} parent=0 // pred_check_branch
    %22 = sbr.rel (0) target = $region21
  $region20: #{tpu_custom_call.1} parent=0 // pred_region
    _
  $region21: #{tpu_custom_call.1} parent=0 // pred_fallthru
    _
  // Predicated region
  $region22: #{tpu_custom_call.1} parent=0 // pred_check
    _
  $region23: #{tpu_custom_call.1} parent=0 // pred_check_branch
    %24 = sbr.rel (0) target = $region25
  $region24: #{tpu_custom_call.1} parent=0 // pred_region
    _
  $region25: #{tpu_custom_call.1} parent=0 // pred_fallthru
    _
  // Predicated region
  $region26: #{tpu_custom_call.1} parent=0 // pred_check
    _
  $region27: #{tpu_custom_call.1} parent=0 // pred_check_branch
    %26 = sbr.rel (0) target = $region29
  $region28: #{tpu_custom_call.1} parent=0 // pred_region
    _
  $region29: #{tpu_custom_call.1} parent=0 // pred_fallthru
    _
  // Predicated region
  $region30: #{tpu_custom_call.1} parent=0 // pred_check
    _
  $region31: #{tpu_custom_call.1} parent=0 // pred_check_branch
    %28 = sbr.rel (0) target = $region33
  $region32: #{tpu_custom_call.1} parent=0 // pred_region
    _
  $region33: #{tpu_custom_call.1} parent=0 // pred_fallthru
    _
  %v29 = vld [vmem:[%s5] sm:$0xff]
  %v30 = vld [vmem:[%s5 + $0x8] sm:$0xff]
  %v31 = vld [vmem:[%s5 + $0x10] sm:$0xff]
  %v32 = vld [vmem:[%s5 + $0x18] sm:$0xff]
  %v33 = vld [vmem:[%s1] sm:$0xff]
  %v34 = vld [vmem:[%s4] sm:$0x1f]
  %vm35 = vcmask 39936
  %v37 = vsel %vm35, %v33, 0
  %vm39 = vcmask 1044480
  %v41 = vsel %vm39, %v34, 0
  %43 = vmatprep.subr.mxu0 0.0
  %44 = vmatpush1.msra.mxu0 %v41
  %45 = vmatprep.subr.mxu0 0.0
  %46 = vmatpush1.msra.mxu0 0.0
  %47 = vmatprep.subr.mxu0 0.0
  %48 = vmatpush1.msra.mxu0 0.0
  %49 = vmatprep.subr.mxu0 0.0
  %50 = vmatpush1.msra.mxu0 0.0
  %51 = vmatprep.subr.mxu0 0.0
  %52 = vmatpush1.msra.mxu0 0.0
  %53 = vmatprep.subr.mxu0 0.0
  %54 = vmatpush1.msra.mxu0 0.0
  %55 = vmatprep.subr.mxu0 0.0
  %56 = vmatpush1.msra.mxu0 0.0
  %57 = vmatprep.subr.mxu0 0.0
  %58 = vmatpush1.msra.mxu0 0.0
  %59 = vmatprep.subr.mxu0 0.0
  %60 = vmatpush1.msra.mxu0 0.0
  %61 = vmatprep.subr.mxu0 0.0
  %62 = vmatpush1.msra.mxu0 0.0
  %63 = vmatprep.subr.mxu0 0.0
  %64 = vmatpush1.msra.mxu0 0.0
  %65 = vmatprep.subr.mxu0 0.0
  %66 = vmatpush1.msra.mxu0 0.0
  %67 = vmatprep.subr.mxu0 0.0
  %68 = vmatpush1.msra.mxu0 0.0
  %69 = vmatprep.subr.mxu0 0.0
  %70 = vmatpush1.msra.mxu0 0.0
  %71 = vmatprep.subr.mxu0 0.0
  %72 = vmatpush1.msra.mxu0 0.0
  %73 = vmatprep.subr.mxu0 0.0
  %74 = vmatpush1.msra.mxu0 0.0
  %75 = vmatprep.subr.mxu0 0.0
  %76 = vmatpush1.msra.mxu0 0.0
  %77 = vmatprep.subr.mxu0 0.0
  %78 = vmatpush1.msra.mxu0 0.0
  %79 = vmatprep.subr.mxu0 0.0
  %80 = vmatpush1.msra.mxu0 0.0
  %81 = vmatprep.subr.mxu0 0.0
  %82 = vmatpush1.msra.mxu0 0.0
  %83 = vmatprep.subr.mxu0 0.0
  %84 = vmatpush1.msra.mxu0 0.0
  %85 = vmatprep.subr.mxu0 0.0
  %86 = vmatpush1.msra.mxu0 0.0
  %87 = vmatprep.subr.mxu0 0.0
  %88 = vmatpush1.msra.mxu0 0.0
  %89 = vmatprep.subr.mxu0 0.0
  %90 = vmatpush1.msra.mxu0 0.0
  %91 = vmatprep.subr.mxu0 0.0
  %92 = vmatpush1.msra.mxu0 0.0
  %93 = vmatprep.subr.mxu0 0.0
  %94 = vmatpush1.msra.mxu0 0.0
  %95 = vmatprep.subr.mxu0 0.0
  %96 = vmatpush1.msra.mxu0 0.0
  %97 = vmatprep.subr.mxu0 0.0
  %98 = vmatpush1.msra.mxu0 0.0
  %99 = vmatprep.subr.mxu0 0.0
  %100 = vmatpush1.msra.mxu0 0.0
  %101 = vmatprep.subr.mxu0 0.0
  %102 = vmatpush1.msra.mxu0 0.0
  %103 = vmatprep.subr.mxu0 0.0
  %104 = vmatpush1.msra.mxu0 0.0
  %105 = vmatprep.subr.mxu0 0.0
  %106 = vmatpush1.msra.mxu0 0.0
  %107 = vmatprep.mubr.f32.mxu0 0.0
  %108 = vmatmul.mubr.f32.gmra.mrb[0].mxu0 %v37
  %v109 = vpop.f32.mrb[0].mxu0
  %v110 = vadd.f32 0.0, %v109
  %v111 = vpop.f32.mrb[0].mxu0
  %112 = vdwg.mxu0
  %v113 = vld [vmem:[%s0] sm:$0xff]
  %v114 = vld [vmem:[%s0 + $0x8] sm:$0xff]
  %v115 = vld [vmem:[%s0 + $0x10] sm:$0xff]
  %v116 = vld [vmem:[%s0 + $0x18] sm:$0xff]
  %v117 = vld [vmem:[%s0 + $0x20] sm:$0xff]
  %v118 = vld [vmem:[%s0 + $0x28] sm:$0xff]
  %v119 = vld [vmem:[%s0 + $0x30] sm:$0xff]
  %v120 = vld [vmem:[%s0 + $0x38] sm:$0xff]
  %v121 = vld [vmem:[%s3] sm:$0x3f]
  %vm122 = vcmask 48128
  %v124 = vsel %vm122, %v113, 0
  %v127 = vsel %vm122, %v114, 0
  %v130 = vsel %vm122, %v115, 0
  %v133 = vsel %vm122, %v116, 0
  %v136 = vsel %vm122, %v117, 0
  %v139 = vsel %vm122, %v118, 0
  %v142 = vsel %vm122, %v119, 0
  %v145 = vsel %vm122, %v120, 0
  %vm147 = vcmask 1045504
  %v149 = vsel %vm147, %v121, 0
  %151 = vmatprep.subr.mxu0 0.0
  %152 = vmatpush1.msra.mxu0 %v149
  %153 = vmatprep.subr.mxu0 0.0
  %154 = vmatpush1.msra.mxu0 0.0
  %155 = vmatprep.subr.mxu0 0.0
  %156 = vmatpush1.msra.mxu0 0.0
  %157 = vmatprep.subr.mxu0 0.0
  %158 = vmatpush1.msra.mxu0 0.0
  %159 = vmatprep.subr.mxu0 0.0
  %160 = vmatpush1.msra.mxu0 0.0
  %161 = vmatprep.subr.mxu0 0.0
  %162 = vmatpush1.msra.mxu0 0.0
  %163 = vmatprep.subr.mxu0 0.0
  %164 = vmatpush1.msra.mxu0 0.0
  %165 = vmatprep.subr.mxu0 0.0
  %166 = vmatpush1.msra.mxu0 0.0
  %167 = vmatprep.subr.mxu0 0.0
  %168 = vmatpush1.msra.mxu0 0.0
  %169 = vmatprep.subr.mxu0 0.0
  %170 = vmatpush1.msra.mxu0 0.0
  %171 = vmatprep.subr.mxu0 0.0
  %172 = vmatpush1.msra.mxu0 0.0
  %173 = vmatprep.subr.mxu0 0.0
  %174 = vmatpush1.msra.mxu0 0.0
  %175 = vmatprep.subr.mxu0 0.0
  %176 = vmatpush1.msra.mxu0 0.0
  %177 = vmatprep.subr.mxu0 0.0
  %178 = vmatpush1.msra.mxu0 0.0
  %179 = vmatprep.subr.mxu0 0.0
  %180 = vmatpush1.msra.mxu0 0.0
  %181 = vmatprep.subr.mxu0 0.0
  %182 = vmatpush1.msra.mxu0 0.0
  %183 = vmatprep.subr.mxu0 0.0
  %184 = vmatpush1.msra.mxu0 0.0
  %185 = vmatprep.subr.mxu0 0.0
  %186 = vmatpush1.msra.mxu0 0.0
  %187 = vmatprep.subr.mxu0 0.0
  %188 = vmatpush1.msra.mxu0 0.0
  %189 = vmatprep.subr.mxu0 0.0
  %190 = vmatpush1.msra.mxu0 0.0
  %191 = vmatprep.subr.mxu0 0.0
  %192 = vmatpush1.msra.mxu0 0.0
  %193 = vmatprep.subr.mxu0 0.0
  %194 = vmatpush1.msra.mxu0 0.0
  %195 = vmatprep.subr.mxu0 0.0
  %196 = vmatpush1.msra.mxu0 0.0
  %197 = vmatprep.subr.mxu0 0.0
  %198 = vmatpush1.msra.mxu0 0.0
  %199 = vmatprep.subr.mxu0 0.0
  %200 = vmatpush1.msra.mxu0 0.0
  %201 = vmatprep.subr.mxu0 0.0
  %202 = vmatpush1.msra.mxu0 0.0
  %203 = vmatprep.subr.mxu0 0.0
  %204 = vmatpush1.msra.mxu0 0.0
  %205 = vmatprep.subr.mxu0 0.0
  %206 = vmatpush1.msra.mxu0 0.0
  %207 = vmatprep.subr.mxu0 0.0
  %208 = vmatpush1.msra.mxu0 0.0
  %209 = vmatprep.subr.mxu0 0.0
  %210 = vmatpush1.msra.mxu0 0.0
  %211 = vmatprep.subr.mxu0 0.0
  %212 = vmatpush1.msra.mxu0 0.0
  %213 = vmatprep.subr.mxu0 0.0
  %214 = vmatpush1.msra.mxu0 0.0
  %215 = vmatprep.mubr.f32.mxu0 0.0
  %216 = vmatmul.mubr.f32.gmra.mrb[0].mxu0 %v124
  %v217 = vpop.f32.mrb[0].mxu0
  %v218 = vadd.f32 %v110, %v217
  %v219 = vpop.f32.mrb[0].mxu0
  %220 = vmatprep.mubr.f32.mxu0 0.0
  %221 = vmatmul.mubr.f32.gmra.mrb[0].mxu0 %v127
  %v222 = vpop.f32.mrb[0].mxu0
  %v223 = vadd.f32 %v110, %v222
  %v224 = vpop.f32.mrb[0].mxu0
  %225 = vmatprep.mubr.f32.mxu0 0.0
  %226 = vmatmul.mubr.f32.gmra.mrb[0].mxu0 %v130
  %v227 = vpop.f32.mrb[0].mxu0
  %v228 = vadd.f32 %v110, %v227
  %v229 = vpop.f32.mrb[0].mxu0
  %230 = vmatprep.mubr.f32.mxu0 0.0
  %231 = vmatmul.mubr.f32.gmra.mrb[0].mxu0 %v133
  %v232 = vpop.f32.mrb[0].mxu0
  %v233 = vadd.f32 %v110, %v232
  %v234 = vpop.f32.mrb[0].mxu0
  %235 = vmatprep.mubr.f32.mxu0 0.0
  %236 = vmatmul.mubr.f32.gmra.mrb[0].mxu0 %v136
  %v237 = vpop.f32.mrb[0].mxu0
  %v238 = vadd.f32 %v110, %v237
  %v239 = vpop.f32.mrb[0].mxu0
  %240 = vmatprep.mubr.f32.mxu0 0.0
  %241 = vmatmul.mubr.f32.gmra.mrb[0].mxu0 %v139
  %v242 = vpop.f32.mrb[0].mxu0
  %v243 = vadd.f32 %v110, %v242
  %v244 = vpop.f32.mrb[0].mxu0
  %245 = vmatprep.mubr.f32.mxu0 0.0
  %246 = vmatmul.mubr.f32.gmra.mrb[0].mxu0 %v142
  %v247 = vpop.f32.mrb[0].mxu0
  %v248 = vadd.f32 %v110, %v247
  %v249 = vpop.f32.mrb[0].mxu0
  %250 = vmatprep.mubr.f32.mxu0 0.0
  %251 = vmatmul.mubr.f32.gmra.mrb[0].mxu0 %v145
  %v252 = vpop.f32.mrb[0].mxu0
  %v253 = vadd.f32 %v110, %v252
  %v254 = vpop.f32.mrb[0].mxu0
  %255 = vdwg.mxu0
  %v256 = vld [vmem:[%s2] sm:$0xff]
  %v257 = vld [vmem:[%s7] sm:$0xff]
  %v258 = vld [vmem:[%s7 + $0x8] sm:$0xff]
  %v259 = vld [vmem:[%s7 + $0x10] sm:$0xff]
  %v260 = vld [vmem:[%s7 + $0x18] sm:$0xff]
  %v261 = vld [vmem:[%s7 + $0x20] sm:$0xff]
  %v262 = vld [vmem:[%s7 + $0x28] sm:$0xff]
  %v263 = vld [vmem:[%s7 + $0x30] sm:$0x1f]
  %vm264 = vcmask 261120
  %v266 = vsel %vm264, 0.0, 0
  %268 = vmatprep.subr.mxu0 0.0
  %269 = vmatpush1.msra.mxu0 %v29
  %270 = vmatprep.subr.mxu0 0.0
  %271 = vmatpush1.msra.mxu0 %v30
  %272 = vmatprep.subr.mxu0 0.0
  %273 = vmatpush1.msra.mxu0 %v31
  %274 = vmatprep.subr.mxu0 0.0
  %275 = vmatpush1.msra.mxu0 %v32
  %276 = vmatprep.subr.mxu0 0.0
  %277 = vmatpush1.msra.mxu0 0.0
  %278 = vmatprep.subr.mxu0 0.0
  %279 = vmatpush1.msra.mxu0 0.0
  %280 = vmatprep.subr.mxu0 0.0
  %281 = vmatpush1.msra.mxu0 0.0
  %282 = vmatprep.subr.mxu0 0.0
  %283 = vmatpush1.msra.mxu0 0.0
  %284 = vmatprep.subr.mxu0 0.0
  %285 = vmatpush1.msra.mxu0 0.0
  %286 = vmatprep.subr.mxu0 0.0
  %287 = vmatpush1.msra.mxu0 0.0
  %288 = vmatprep.subr.mxu0 0.0
  %289 = vmatpush1.msra.mxu0 0.0
  %290 = vmatprep.subr.mxu0 0.0
  %291 = vmatpush1.msra.mxu0 0.0
  %292 = vmatprep.subr.mxu0 0.0
  %293 = vmatpush1.msra.mxu0 0.0
  %294 = vmatprep.subr.mxu0 0.0
  %295 = vmatpush1.msra.mxu0 0.0
  %296 = vmatprep.subr.mxu0 0.0
  %297 = vmatpush1.msra.mxu0 0.0
  %298 = vmatprep.subr.mxu0 0.0
  %299 = vmatpush1.msra.mxu0 0.0
  %300 = vmatprep.subr.mxu0 0.0
  %301 = vmatpush1.msra.mxu0 0.0
  %302 = vmatprep.subr.mxu0 0.0
  %303 = vmatpush1.msra.mxu0 0.0
  %304 = vmatprep.subr.mxu0 0.0
  %305 = vmatpush1.msra.mxu0 0.0
  %306 = vmatprep.subr.mxu0 0.0
  %307 = vmatpush1.msra.mxu0 0.0
  %308 = vmatprep.subr.mxu0 0.0
  %309 = vmatpush1.msra.mxu0 0.0
  %310 = vmatprep.subr.mxu0 0.0
  %311 = vmatpush1.msra.mxu0 0.0
  %312 = vmatprep.subr.mxu0 0.0
  %313 = vmatpush1.msra.mxu0 0.0
  %314 = vmatprep.subr.mxu0 0.0
  %315 = vmatpush1.msra.mxu0 0.0
  %316 = vmatprep.subr.mxu0 0.0
  %317 = vmatpush1.msra.mxu0 0.0
  %318 = vmatprep.subr.mxu0 0.0
  %319 = vmatpush1.msra.mxu0 0.0
  %320 = vmatprep.subr.mxu0 0.0
  %321 = vmatpush1.msra.mxu0 0.0
  %322 = vmatprep.subr.mxu0 0.0
  %323 = vmatpush1.msra.mxu0 0.0
  %324 = vmatprep.subr.mxu0 0.0
  %325 = vmatpush1.msra.mxu0 0.0
  %326 = vmatprep.subr.mxu0 0.0
  %327 = vmatpush1.msra.mxu0 0.0
  %328 = vmatprep.subr.mxu0 0.0
  %329 = vmatpush1.msra.mxu0 0.0
  %330 = vmatprep.subr.mxu0 0.0
  %331 = vmatpush1.msra.mxu0 0.0
  %332 = vmatprep.mubr.f32.mxu0 0.0
  %333 = vmatmul.mubr.f32.gmra.mrb[0].mxu0 %v266
  %v334 = vpop.f32.mrb[0].mxu0
  %v335 = vadd.f32 0.0, %v334
  %v336 = vpop.f32.mrb[0].mxu0
  %337 = vdwg.mxu0
  %v338 = vadd.f32 %v218, %v335
  %v339 = vxor.u32 %v338, 2147483648
  %v340 = vmul.f32 %v339, 1.442695
  %v341 = vpow.pop %v340
  %v342 = vadd.f32 %v341, 1.0
  %v343 = vrcp.pop %v342
  %v344 = vmul.f32 1.0, %v343
  %v345 = vmul.f32 %v344, 2.0
  %v346 = vsub.f32 %v345, 1.0
  %v347 = vmul.f32 %v344, 0.0
  %349 = vrot.lane.b32.xlu0 %v346, 64
  %v350 = vpop.permute.xlu0 %349
  %v352 = vmul.f32 %v344, %v350
  %354 = vrot.lane.b32.xlu0 %v352, 32
  %v355 = vpop.permute.xlu0 %354
  %v357 = vadd.f32 %v347, %v355
  %v358 = vtanh.pop %v357
  %360 = vrot.lane.b32.xlu0 %v358, 64
  %v361 = vpop.permute.xlu0 %360
  %v363 = vmul.f32 %v344, %v361
  %365 = vrot.lane.b32.xlu0 %v363, 32
  %v366 = vpop.permute.xlu0 %365
  %368 = vst.msk [vmem:[#allocation2] sm:$0xff] %vm264, %v366
  %v369 = vsel %vm264, %v366, 0
  %371 = vmatprep.subr.mxu0 0.0
  %372 = vmatpush1.msra.mxu0 %v29
  %373 = vmatprep.subr.mxu0 0.0
  %374 = vmatpush1.msra.mxu0 %v30
  %375 = vmatprep.subr.mxu0 0.0
  %376 = vmatpush1.msra.mxu0 %v31
  %377 = vmatprep.subr.mxu0 0.0
  %378 = vmatpush1.msra.mxu0 %v32
  %379 = vmatprep.subr.mxu0 0.0
  %380 = vmatpush1.msra.mxu0 0.0
  %381 = vmatprep.subr.mxu0 0.0
  %382 = vmatpush1.msra.mxu0 0.0
  %383 = vmatprep.subr.mxu0 0.0
  %384 = vmatpush1.msra.mxu0 0.0
  %385 = vmatprep.subr.mxu0 0.0
  %386 = vmatpush1.msra.mxu0 0.0
  %387 = vmatprep.subr.mxu0 0.0
  %388 = vmatpush1.msra.mxu0 0.0
  %389 = vmatprep.subr.mxu0 0.0
  %390 = vmatpush1.msra.mxu0 0.0
  %391 = vmatprep.subr.mxu0 0.0
  %392 = vmatpush1.msra.mxu0 0.0
  %393 = vmatprep.subr.mxu0 0.0
  %394 = vmatpush1.msra.mxu0 0.0
  %395 = vmatprep.subr.mxu0 0.0
  %396 = vmatpush1.msra.mxu0 0.0
  %397 = vmatprep.subr.mxu0 0.0
  %398 = vmatpush1.msra.mxu0 0.0
  %399 = vmatprep.subr.mxu0 0.0
  %400 = vmatpush1.msra.mxu0 0.0
  %401 = vmatprep.subr.mxu0 0.0
  %402 = vmatpush1.msra.mxu0 0.0
  %403 = vmatprep.subr.mxu0 0.0
  %404 = vmatpush1.msra.mxu0 0.0
  %405 = vmatprep.subr.mxu0 0.0
  %406 = vmatpush1.msra.mxu0 0.0
  %407 = vmatprep.subr.mxu0 0.0
  %408 = vmatpush1.msra.mxu0 0.0
  %409 = vmatprep.subr.mxu0 0.0
  %410 = vmatpush1.msra.mxu0 0.0
  %411 = vmatprep.subr.mxu0 0.0
  %412 = vmatpush1.msra.mxu0 0.0
  %413 = vmatprep.subr.mxu0 0.0
  %414 = vmatpush1.msra.mxu0 0.0
  %415 = vmatprep.subr.mxu0 0.0
  %416 = vmatpush1.msra.mxu0 0.0
  %417 = vmatprep.subr.mxu0 0.0
  %418 = vmatpush1.msra.mxu0 0.0
  %419 = vmatprep.subr.mxu0 0.0
  %420 = vmatpush1.msra.mxu0 0.0
  %421 = vmatprep.subr.mxu0 0.0
  %422 = vmatpush1.msra.mxu0 0.0
  %423 = vmatprep.subr.mxu0 0.0
  %424 = vmatpush1.msra.mxu0 0.0
  %425 = vmatprep.subr.mxu0 0.0
  %426 = vmatpush1.msra.mxu0 0.0
  %427 = vmatprep.subr.mxu0 0.0
  %428 = vmatpush1.msra.mxu0 0.0
  %429 = vmatprep.subr.mxu0 0.0
  %430 = vmatpush1.msra.mxu0 0.0
  %431 = vmatprep.subr.mxu0 0.0
  %432 = vmatpush1.msra.mxu0 0.0
  %433 = vmatprep.subr.mxu0 0.0
  %434 = vmatpush1.msra.mxu0 0.0
  %435 = vmatprep.mubr.f32.mxu0 0.0
  %436 = vmatmul.mubr.f32.gmra.mrb[0].mxu0 %v369
  %v437 = vpop.f32.mrb[0].mxu0
  %v438 = vadd.f32 0.0, %v437
  %v439 = vpop.f32.mrb[0].mxu0
  %440 = vdwg.mxu0
  %v441 = vadd.f32 %v223, %v438
  %v442 = vxor.u32 %v441, 2147483648
  %v443 = vmul.f32 %v442, 1.442695
  %v444 = vpow.pop %v443
  %v445 = vadd.f32 %v444, 1.0
  %v446 = vrcp.pop %v445
  %v447 = vmul.f32 1.0, %v446
  %v448 = vmul.f32 %v447, 2.0
  %v449 = vsub.f32 %v448, 1.0
  %v450 = vmul.f32 %v447, %v357
  %452 = vrot.lane.b32.xlu0 %v449, 64
  %v453 = vpop.permute.xlu0 %452
  %v455 = vmul.f32 %v447, %v453
  %457 = vrot.lane.b32.xlu0 %v455, 32
  %v458 = vpop.permute.xlu0 %457
  %v460 = vadd.f32 %v450, %v458
  %v461 = vtanh.pop %v460
  %463 = vrot.lane.b32.xlu0 %v461, 64
  %v464 = vpop.permute.xlu0 %463
  %v466 = vmul.f32 %v447, %v464
  %468 = vrot.lane.b32.xlu0 %v466, 64
  %v469 = vpop.permute.xlu0 %468
  %vm471 = vcmask 523520
  %472 = vst.msk [vmem:[#allocation2] sm:$0xff] %vm471, %v469
  %473 = vrot.lane.b32.xlu0 %v466, 32
  %v474 = vpop.permute.xlu0 %473
  %v475 = vsel %vm264, %v474, 0
  %477 = vmatprep.subr.mxu0 0.0
  %478 = vmatpush1.msra.mxu0 %v29
  %479 = vmatprep.subr.mxu0 0.0
  %480 = vmatpush1.msra.mxu0 %v30
  %481 = vmatprep.subr.mxu0 0.0
  %482 = vmatpush1.msra.mxu0 %v31
  %483 = vmatprep.subr.mxu0 0.0
  %484 = vmatpush1.msra.mxu0 %v32
  %485 = vmatprep.subr.mxu0 0.0
  %486 = vmatpush1.msra.mxu0 0.0
  %487 = vmatprep.subr.mxu0 0.0
  %488 = vmatpush1.msra.mxu0 0.0
  %489 = vmatprep.subr.mxu0 0.0
  %490 = vmatpush1.msra.mxu0 0.0
  %491 = vmatprep.subr.mxu0 0.0
  %492 = vmatpush1.msra.mxu0 0.0
  %493 = vmatprep.subr.mxu0 0.0
  %494 = vmatpush1.msra.mxu0 0.0
  %495 = vmatprep.subr.mxu0 0.0
  %496 = vmatpush1.msra.mxu0 0.0
  %497 = vmatprep.subr.mxu0 0.0
  %498 = vmatpush1.msra.mxu0 0.0
  %499 = vmatprep.subr.mxu0 0.0
  %500 = vmatpush1.msra.mxu0 0.0
  %501 = vmatprep.subr.mxu0 0.0
  %502 = vmatpush1.msra.mxu0 0.0
  %503 = vmatprep.subr.mxu0 0.0
  %504 = vmatpush1.msra.mxu0 0.0
  %505 = vmatprep.subr.mxu0 0.0
  %506 = vmatpush1.msra.mxu0 0.0
  %507 = vmatprep.subr.mxu0 0.0
  %508 = vmatpush1.msra.mxu0 0.0
  %509 = vmatprep.subr.mxu0 0.0
  %510 = vmatpush1.msra.mxu0 0.0
  %511 = vmatprep.subr.mxu0 0.0
  %512 = vmatpush1.msra.mxu0 0.0
  %513 = vmatprep.subr.mxu0 0.0
  %514 = vmatpush1.msra.mxu0 0.0
  %515 = vmatprep.subr.mxu0 0.0
  %516 = vmatpush1.msra.mxu0 0.0
  %517 = vmatprep.subr.mxu0 0.0
  %518 = vmatpush1.msra.mxu0 0.0
  %519 = vmatprep.subr.mxu0 0.0
  %520 = vmatpush1.msra.mxu0 0.0
  %521 = vmatprep.subr.mxu0 0.0
  %522 = vmatpush1.msra.mxu0 0.0
  %523 = vmatprep.subr.mxu0 0.0
  %524 = vmatpush1.msra.mxu0 0.0
  %525 = vmatprep.subr.mxu0 0.0
  %526 = vmatpush1.msra.mxu0 0.0
  %527 = vmatprep.subr.mxu0 0.0
  %528 = vmatpush1.msra.mxu0 0.0
  %529 = vmatprep.subr.mxu0 0.0
  %530 = vmatpush1.msra.mxu0 0.0
  %531 = vmatprep.subr.mxu0 0.0
  %532 = vmatpush1.msra.mxu0 0.0
  %533 = vmatprep.subr.mxu0 0.0
  %534 = vmatpush1.msra.mxu0 0.0
  %535 = vmatprep.subr.mxu0 0.0
  %536 = vmatpush1.msra.mxu0 0.0
  %537 = vmatprep.subr.mxu0 0.0
  %538 = vmatpush1.msra.mxu0 0.0
  %539 = vmatprep.subr.mxu0 0.0
  %540 = vmatpush1.msra.mxu0 0.0
  %541 = vmatprep.mubr.f32.mxu0 0.0
  %542 = vmatmul.mubr.f32.gmra.mrb[0].mxu0 %v475
  %v543 = vpop.f32.mrb[0].mxu0
  %v544 = vadd.f32 0.0, %v543
  %v545 = vpop.f32.mrb[0].mxu0
  %546 = vdwg.mxu0
  %v547 = vadd.f32 %v228, %v544
  %v548 = vxor.u32 %v547, 2147483648
  %v549 = vmul.f32 %v548, 1.442695
  %v550 = vpow.pop %v549
  %v551 = vadd.f32 %v550, 1.0
  %v552 = vrcp.pop %v551
  %v553 = vmul.f32 1.0, %v552
  %v554 = vmul.f32 %v553, 2.0
  %v555 = vsub.f32 %v554, 1.0
  %v556 = vmul.f32 %v553, %v460
  %558 = vrot.lane.b32.xlu0 %v555, 64
  %v559 = vpop.permute.xlu0 %558
  %v561 = vmul.f32 %v553, %v559
  %563 = vrot.lane.b32.xlu0 %v561, 32
  %v564 = vpop.permute.xlu0 %563
  %v566 = vadd.f32 %v556, %v564
  %v567 = vtanh.pop %v566
  %569 = vrot.lane.b32.xlu0 %v567, 64
  %v570 = vpop.permute.xlu0 %569
  %v572 = vmul.f32 %v553, %v570
  %574 = vrot.lane.b32.xlu0 %v572, 96
  %v575 = vpop.permute.xlu0 %574
  %vm577 = vcmask 785920
  %578 = vst.msk [vmem:[#allocation2] sm:$0xff] %vm577, %v575
  %579 = vrot.lane.b32.xlu0 %v572, 32
  %v580 = vpop.permute.xlu0 %579
  %v581 = vsel %vm264, %v580, 0
  %583 = vmatprep.subr.mxu0 0.0
  %584 = vmatpush1.msra.mxu0 %v29
  %585 = vmatprep.subr.mxu0 0.0
  %586 = vmatpush1.msra.mxu0 %v30
  %587 = vmatprep.subr.mxu0 0.0
  %588 = vmatpush1.msra.mxu0 %v31
  %589 = vmatprep.subr.mxu0 0.0
  %590 = vmatpush1.msra.mxu0 %v32
  %591 = vmatprep.subr.mxu0 0.0
  %592 = vmatpush1.msra.mxu0 0.0
  %593 = vmatprep.subr.mxu0 0.0
  %594 = vmatpush1.msra.mxu0 0.0
  %595 = vmatprep.subr.mxu0 0.0
  %596 = vmatpush1.msra.mxu0 0.0
  %597 = vmatprep.subr.mxu0 0.0
  %598 = vmatpush1.msra.mxu0 0.0
  %599 = vmatprep.subr.mxu0 0.0
  %600 = vmatpush1.msra.mxu0 0.0
  %601 = vmatprep.subr.mxu0 0.0
  %602 = vmatpush1.msra.mxu0 0.0
  %603 = vmatprep.subr.mxu0 0.0
  %604 = vmatpush1.msra.mxu0 0.0
  %605 = vmatprep.subr.mxu0 0.0
  %606 = vmatpush1.msra.mxu0 0.0
  %607 = vmatprep.subr.mxu0 0.0
  %608 = vmatpush1.msra.mxu0 0.0
  %609 = vmatprep.subr.mxu0 0.0
  %610 = vmatpush1.msra.mxu0 0.0
  %611 = vmatprep.subr.mxu0 0.0
  %612 = vmatpush1.msra.mxu0 0.0
  %613 = vmatprep.subr.mxu0 0.0
  %614 = vmatpush1.msra.mxu0 0.0
  %615 = vmatprep.subr.mxu0 0.0
  %616 = vmatpush1.msra.mxu0 0.0
  %617 = vmatprep.subr.mxu0 0.0
  %618 = vmatpush1.msra.mxu0 0.0
  %619 = vmatprep.subr.mxu0 0.0
  %620 = vmatpush1.msra.mxu0 0.0
  %621 = vmatprep.subr.mxu0 0.0
  %622 = vmatpush1.msra.mxu0 0.0
  %623 = vmatprep.subr.mxu0 0.0
  %624 = vmatpush1.msra.mxu0 0.0
  %625 = vmatprep.subr.mxu0 0.0
  %626 = vmatpush1.msra.mxu0 0.0
  %627 = vmatprep.subr.mxu0 0.0
  %628 = vmatpush1.msra.mxu0 0.0
  %629 = vmatprep.subr.mxu0 0.0
  %630 = vmatpush1.msra.mxu0 0.0
  %631 = vmatprep.subr.mxu0 0.0
  %632 = vmatpush1.msra.mxu0 0.0
  %633 = vmatprep.subr.mxu0 0.0
  %634 = vmatpush1.msra.mxu0 0.0
  %635 = vmatprep.subr.mxu0 0.0
  %636 = vmatpush1.msra.mxu0 0.0
  %637 = vmatprep.subr.mxu0 0.0
  %638 = vmatpush1.msra.mxu0 0.0
  %639 = vmatprep.subr.mxu0 0.0
  %640 = vmatpush1.msra.mxu0 0.0
  %641 = vmatprep.subr.mxu0 0.0
  %642 = vmatpush1.msra.mxu0 0.0
  %643 = vmatprep.subr.mxu0 0.0
  %644 = vmatpush1.msra.mxu0 0.0
  %645 = vmatprep.subr.mxu0 0.0
  %646 = vmatpush1.msra.mxu0 0.0
  %647 = vmatprep.mubr.f32.mxu0 0.0
  %648 = vmatmul.mubr.f32.gmra.mrb[0].mxu0 %v581
  %v649 = vpop.f32.mrb[0].mxu0
  %v650 = vadd.f32 0.0, %v649
  %v651 = vpop.f32.mrb[0].mxu0
  %652 = vdwg.mxu0
  %v653 = vadd.f32 %v233, %v650
  %v654 = vxor.u32 %v653, 2147483648
  %v655 = vmul.f32 %v654, 1.442695
  %v656 = vpow.pop %v655
  %v657 = vadd.f32 %v656, 1.0
  %v658 = vrcp.pop %v657
  %v659 = vmul.f32 1.0, %v658
  %v660 = vmul.f32 %v659, 2.0
  %v661 = vsub.f32 %v660, 1.0
  %v662 = vmul.f32 %v659, %v566
  %664 = vrot.lane.b32.xlu0 %v661, 64
  %v665 = vpop.permute.xlu0 %664
  %v667 = vmul.f32 %v659, %v665
  %669 = vrot.lane.b32.xlu0 %v667, 32
  %v670 = vpop.permute.xlu0 %669
  %v672 = vadd.f32 %v662, %v670
  %v673 = vtanh.pop %v672
  %675 = vrot.lane.b32.xlu0 %v673, 64
  %v676 = vpop.permute.xlu0 %675
  %v678 = vmul.f32 %v659, %v676
  %vm679 = vcmask 1048320
  %680 = vst.msk [vmem:[#allocation2] sm:$0xff] %vm679, %v678
  %682 = vrot.lane.b32.xlu0 %v678, 32
  %v683 = vpop.permute.xlu0 %682
  %v684 = vsel %vm264, %v683, 0
  %686 = vmatprep.subr.mxu0 0.0
  %687 = vmatpush1.msra.mxu0 %v29
  %688 = vmatprep.subr.mxu0 0.0
  %689 = vmatpush1.msra.mxu0 %v30
  %690 = vmatprep.subr.mxu0 0.0
  %691 = vmatpush1.msra.mxu0 %v31
  %692 = vmatprep.subr.mxu0 0.0
  %693 = vmatpush1.msra.mxu0 %v32
  %694 = vmatprep.subr.mxu0 0.0
  %695 = vmatpush1.msra.mxu0 0.0
  %696 = vmatprep.subr.mxu0 0.0
  %697 = vmatpush1.msra.mxu0 0.0
  %698 = vmatprep.subr.mxu0 0.0
  %699 = vmatpush1.msra.mxu0 0.0
  %700 = vmatprep.subr.mxu0 0.0
  %701 = vmatpush1.msra.mxu0 0.0
  %702 = vmatprep.subr.mxu0 0.0
  %703 = vmatpush1.msra.mxu0 0.0
  %704 = vmatprep.subr.mxu0 0.0
  %705 = vmatpush1.msra.mxu0 0.0
  %706 = vmatprep.subr.mxu0 0.0
  %707 = vmatpush1.msra.mxu0 0.0
  %708 = vmatprep.subr.mxu0 0.0
  %709 = vmatpush1.msra.mxu0 0.0
  %710 = vmatprep.subr.mxu0 0.0
  %711 = vmatpush1.msra.mxu0 0.0
  %712 = vmatprep.subr.mxu0 0.0
  %713 = vmatpush1.msra.mxu0 0.0
  %714 = vmatprep.subr.mxu0 0.0
  %715 = vmatpush1.msra.mxu0 0.0
  %716 = vmatprep.subr.mxu0 0.0
  %717 = vmatpush1.msra.mxu0 0.0
  %718 = vmatprep.subr.mxu0 0.0
  %719 = vmatpush1.msra.mxu0 0.0
  %720 = vmatprep.subr.mxu0 0.0
  %721 = vmatpush1.msra.mxu0 0.0
  %722 = vmatprep.subr.mxu0 0.0
  %723 = vmatpush1.msra.mxu0 0.0
  %724 = vmatprep.subr.mxu0 0.0
  %725 = vmatpush1.msra.mxu0 0.0
  %726 = vmatprep.subr.mxu0 0.0
  %727 = vmatpush1.msra.mxu0 0.0
  %728 = vmatprep.subr.mxu0 0.0
  %729 = vmatpush1.msra.mxu0 0.0
  %730 = vmatprep.subr.mxu0 0.0
  %731 = vmatpush1.msra.mxu0 0.0
  %732 = vmatprep.subr.mxu0 0.0
  %733 = vmatpush1.msra.mxu0 0.0
  %734 = vmatprep.subr.mxu0 0.0
  %735 = vmatpush1.msra.mxu0 0.0
  %736 = vmatprep.subr.mxu0 0.0
  %737 = vmatpush1.msra.mxu0 0.0
  %738 = vmatprep.subr.mxu0 0.0
  %739 = vmatpush1.msra.mxu0 0.0
  %740 = vmatprep.subr.mxu0 0.0
  %741 = vmatpush1.msra.mxu0 0.0
  %742 = vmatprep.subr.mxu0 0.0
  %743 = vmatpush1.msra.mxu0 0.0
  %744 = vmatprep.subr.mxu0 0.0
  %745 = vmatpush1.msra.mxu0 0.0
  %746 = vmatprep.subr.mxu0 0.0
  %747 = vmatpush1.msra.mxu0 0.0
  %748 = vmatprep.subr.mxu0 0.0
  %749 = vmatpush1.msra.mxu0 0.0
  %750 = vmatprep.mubr.f32.mxu0 0.0
  %751 = vmatmul.mubr.f32.gmra.mrb[0].mxu0 %v684
  %v752 = vpop.f32.mrb[0].mxu0
  %v753 = vadd.f32 0.0, %v752
  %v754 = vpop.f32.mrb[0].mxu0
  %755 = vdwg.mxu0
  %v756 = vadd.f32 %v238, %v753
  %v757 = vxor.u32 %v756, 2147483648
  %v758 = vmul.f32 %v757, 1.442695
  %v759 = vpow.pop %v758
  %v760 = vadd.f32 %v759, 1.0
  %v761 = vrcp.pop %v760
  %v762 = vmul.f32 1.0, %v761
  %v763 = vmul.f32 %v762, 2.0
  %v764 = vsub.f32 %v763, 1.0
  %v765 = vmul.f32 %v762, %v672
  %767 = vrot.lane.b32.xlu0 %v764, 64
  %v768 = vpop.permute.xlu0 %767
  %v770 = vmul.f32 %v762, %v768
  %772 = vrot.lane.b32.xlu0 %v770, 32
  %v773 = vpop.permute.xlu0 %772
  %v775 = vadd.f32 %v765, %v773
  %v776 = vtanh.pop %v775
  %778 = vrot.lane.b32.xlu0 %v776, 64
  %v779 = vpop.permute.xlu0 %778
  %v781 = vmul.f32 %v762, %v779
  %783 = vrot.lane.b32.xlu0 %v781, 32
  %v784 = vpop.permute.xlu0 %783
  %786 = vst.msk [vmem:[#allocation2 + $0x8] sm:$0xff] %vm264, %v784
  %v787 = vsel %vm264, %v784, 0
  %789 = vmatprep.subr.mxu0 0.0
  %790 = vmatpush1.msra.mxu0 %v29
  %791 = vmatprep.subr.mxu0 0.0
  %792 = vmatpush1.msra.mxu0 %v30
  %793 = vmatprep.subr.mxu0 0.0
  %794 = vmatpush1.msra.mxu0 %v31
  %795 = vmatprep.subr.mxu0 0.0
  %796 = vmatpush1.msra.mxu0 %v32
  %797 = vmatprep.subr.mxu0 0.0
  %798 = vmatpush1.msra.mxu0 0.0
  %799 = vmatprep.subr.mxu0 0.0
  %800 = vmatpush1.msra.mxu0 0.0
  %801 = vmatprep.subr.mxu0 0.0
  %802 = vmatpush1.msra.mxu0 0.0
  %803 = vmatprep.subr.mxu0 0.0
  %804 = vmatpush1.msra.mxu0 0.0
  %805 = vmatprep.subr.mxu0 0.0
  %806 = vmatpush1.msra.mxu0 0.0
  %807 = vmatprep.subr.mxu0 0.0
  %808 = vmatpush1.msra.mxu0 0.0
  %809 = vmatprep.subr.mxu0 0.0
  %810 = vmatpush1.msra.mxu0 0.0
  %811 = vmatprep.subr.mxu0 0.0
  %812 = vmatpush1.msra.mxu0 0.0
  %813 = vmatprep.subr.mxu0 0.0
  %814 = vmatpush1.msra.mxu0 0.0
  %815 = vmatprep.subr.mxu0 0.0
  %816 = vmatpush1.msra.mxu0 0.0
  %817 = vmatprep.subr.mxu0 0.0
  %818 = vmatpush1.msra.mxu0 0.0
  %819 = vmatprep.subr.mxu0 0.0
  %820 = vmatpush1.msra.mxu0 0.0
  %821 = vmatprep.subr.mxu0 0.0
  %822 = vmatpush1.msra.mxu0 0.0
  %823 = vmatprep.subr.mxu0 0.0
  %824 = vmatpush1.msra.mxu0 0.0
  %825 = vmatprep.subr.mxu0 0.0
  %826 = vmatpush1.msra.mxu0 0.0
  %827 = vmatprep.subr.mxu0 0.0
  %828 = vmatpush1.msra.mxu0 0.0
  %829 = vmatprep.subr.mxu0 0.0
  %830 = vmatpush1.msra.mxu0 0.0
  %831 = vmatprep.subr.mxu0 0.0
  %832 = vmatpush1.msra.mxu0 0.0
  %833 = vmatprep.subr.mxu0 0.0
  %834 = vmatpush1.msra.mxu0 0.0
  %835 = vmatprep.subr.mxu0 0.0
  %836 = vmatpush1.msra.mxu0 0.0
  %837 = vmatprep.subr.mxu0 0.0
  %838 = vmatpush1.msra.mxu0 0.0
  %839 = vmatprep.subr.mxu0 0.0
  %840 = vmatpush1.msra.mxu0 0.0
  %841 = vmatprep.subr.mxu0 0.0
  %842 = vmatpush1.msra.mxu0 0.0
  %843 = vmatprep.subr.mxu0 0.0
  %844 = vmatpush1.msra.mxu0 0.0
  %845 = vmatprep.subr.mxu0 0.0
  %846 = vmatpush1.msra.mxu0 0.0
  %847 = vmatprep.subr.mxu0 0.0
  %848 = vmatpush1.msra.mxu0 0.0
  %849 = vmatprep.subr.mxu0 0.0
  %850 = vmatpush1.msra.mxu0 0.0
  %851 = vmatprep.subr.mxu0 0.0
  %852 = vmatpush1.msra.mxu0 0.0
  %853 = vmatprep.mubr.f32.mxu0 0.0
  %854 = vmatmul.mubr.f32.gmra.mrb[0].mxu0 %v787
  %v855 = vpop.f32.mrb[0].mxu0
  %v856 = vadd.f32 0.0, %v855
  %v857 = vpop.f32.mrb[0].mxu0
  %858 = vdwg.mxu0
  %v859 = vadd.f32 %v243, %v856
  %v860 = vxor.u32 %v859, 2147483648
  %v861 = vmul.f32 %v860, 1.442695
  %v862 = vpow.pop %v861
  %v863 = vadd.f32 %v862, 1.0
  %v864 = vrcp.pop %v863
  %v865 = vmul.f32 1.0, %v864
  %v866 = vmul.f32 %v865, 2.0
  %v867 = vsub.f32 %v866, 1.0
  %v868 = vmul.f32 %v865, %v775
  %870 = vrot.lane.b32.xlu0 %v867, 64
  %v871 = vpop.permute.xlu0 %870
  %v873 = vmul.f32 %v865, %v871
  %875 = vrot.lane.b32.xlu0 %v873, 32
  %v876 = vpop.permute.xlu0 %875
  %v878 = vadd.f32 %v868, %v876
  %v879 = vtanh.pop %v878
  %881 = vrot.lane.b32.xlu0 %v879, 64
  %v882 = vpop.permute.xlu0 %881
  %v884 = vmul.f32 %v865, %v882
  %886 = vrot.lane.b32.xlu0 %v884, 64
  %v887 = vpop.permute.xlu0 %886
  %889 = vst.msk [vmem:[#allocation2 + $0x8] sm:$0xff] %vm471, %v887
  %890 = vrot.lane.b32.xlu0 %v884, 32
  %v891 = vpop.permute.xlu0 %890
  %v892 = vsel %vm264, %v891, 0
  %894 = vmatprep.subr.mxu0 0.0
  %895 = vmatpush1.msra.mxu0 %v29
  %896 = vmatprep.subr.mxu0 0.0
  %897 = vmatpush1.msra.mxu0 %v30
  %898 = vmatprep.subr.mxu0 0.0
  %899 = vmatpush1.msra.mxu0 %v31
  %900 = vmatprep.subr.mxu0 0.0
  %901 = vmatpush1.msra.mxu0 %v32
  %902 = vmatprep.subr.mxu0 0.0
  %903 = vmatpush1.msra.mxu0 0.0
  %904 = vmatprep.subr.mxu0 0.0
  %905 = vmatpush1.msra.mxu0 0.0
  %906 = vmatprep.subr.mxu0 0.0
  %907 = vmatpush1.msra.mxu0 0.0
  %908 = vmatprep.subr.mxu0 0.0
  %909 = vmatpush1.msra.mxu0 0.0
  %910 = vmatprep.subr.mxu0 0.0
  %911 = vmatpush1.msra.mxu0 0.0
  %912 = vmatprep.subr.mxu0 0.0
  %913 = vmatpush1.msra.mxu0 0.0
  %914 = vmatprep.subr.mxu0 0.0
  %915 = vmatpush1.msra.mxu0 0.0
  %916 = vmatprep.subr.mxu0 0.0
  %917 = vmatpush1.msra.mxu0 0.0
  %918 = vmatprep.subr.mxu0 0.0
  %919 = vmatpush1.msra.mxu0 0.0
  %920 = vmatprep.subr.mxu0 0.0
  %921 = vmatpush1.msra.mxu0 0.0
  %922 = vmatprep.subr.mxu0 0.0
  %923 = vmatpush1.msra.mxu0 0.0
  %924 = vmatprep.subr.mxu0 0.0
  %925 = vmatpush1.msra.mxu0 0.0
  %926 = vmatprep.subr.mxu0 0.0
  %927 = vmatpush1.msra.mxu0 0.0
  %928 = vmatprep.subr.mxu0 0.0
  %929 = vmatpush1.msra.mxu0 0.0
  %930 = vmatprep.subr.mxu0 0.0
  %931 = vmatpush1.msra.mxu0 0.0
  %932 = vmatprep.subr.mxu0 0.0
  %933 = vmatpush1.msra.mxu0 0.0
  %934 = vmatprep.subr.mxu0 0.0
  %935 = vmatpush1.msra.mxu0 0.0
  %936 = vmatprep.subr.mxu0 0.0
  %937 = vmatpush1.msra.mxu0 0.0
  %938 = vmatprep.subr.mxu0 0.0
  %939 = vmatpush1.msra.mxu0 0.0
  %940 = vmatprep.subr.mxu0 0.0
  %941 = vmatpush1.msra.mxu0 0.0
  %942 = vmatprep.subr.mxu0 0.0
  %943 = vmatpush1.msra.mxu0 0.0
  %944 = vmatprep.subr.mxu0 0.0
  %945 = vmatpush1.msra.mxu0 0.0
  %946 = vmatprep.subr.mxu0 0.0
  %947 = vmatpush1.msra.mxu0 0.0
  %948 = vmatprep.subr.mxu0 0.0
  %949 = vmatpush1.msra.mxu0 0.0
  %950 = vmatprep.subr.mxu0 0.0
  %951 = vmatpush1.msra.mxu0 0.0
  %952 = vmatprep.subr.mxu0 0.0
  %953 = vmatpush1.msra.mxu0 0.0
  %954 = vmatprep.subr.mxu0 0.0
  %955 = vmatpush1.msra.mxu0 0.0
  %956 = vmatprep.subr.mxu0 0.0
  %957 = vmatpush1.msra.mxu0 0.0
  %958 = vmatprep.mubr.f32.mxu0 0.0
  %959 = vmatmul.mubr.f32.gmra.mrb[0].mxu0 %v892
  %v960 = vpop.f32.mrb[0].mxu0
  %v961 = vadd.f32 0.0, %v960
  %v962 = vpop.f32.mrb[0].mxu0
  %963 = vdwg.mxu0
  %v964 = vadd.f32 %v248, %v961
  %v965 = vxor.u32 %v964, 2147483648
  %v966 = vmul.f32 %v965, 1.442695
  %v967 = vpow.pop %v966
  %v968 = vadd.f32 %v967, 1.0
  %v969 = vrcp.pop %v968
  %v970 = vmul.f32 1.0, %v969
  %v971 = vmul.f32 %v970, 2.0
  %v972 = vsub.f32 %v971, 1.0
  %v973 = vmul.f32 %v970, %v878
  %975 = vrot.lane.b32.xlu0 %v972, 64
  %v976 = vpop.permute.xlu0 %975
  %v978 = vmul.f32 %v970, %v976
  %980 = vrot.lane.b32.xlu0 %v978, 32
  %v981 = vpop.permute.xlu0 %980
  %v983 = vadd.f32 %v973, %v981
  %v984 = vtanh.pop %v983
  %986 = vrot.lane.b32.xlu0 %v984, 64
  %v987 = vpop.permute.xlu0 %986
  %v989 = vmul.f32 %v970, %v987
  %991 = vrot.lane.b32.xlu0 %v989, 96
  %v992 = vpop.permute.xlu0 %991
  %994 = vst.msk [vmem:[#allocation2 + $0x8] sm:$0xff] %vm577, %v992
  %995 = vrot.lane.b32.xlu0 %v989, 32
  %v996 = vpop.permute.xlu0 %995
  %v997 = vsel %vm264, %v996, 0
  %999 = vmatprep.subr.mxu0 0.0
  %1000 = vmatpush1.msra.mxu0 %v29
  %1001 = vmatprep.subr.mxu0 0.0
  %1002 = vmatpush1.msra.mxu0 %v30
  %1003 = vmatprep.subr.mxu0 0.0
  %1004 = vmatpush1.msra.mxu0 %v31
  %1005 = vmatprep.subr.mxu0 0.0
  %1006 = vmatpush1.msra.mxu0 %v32
  %1007 = vmatprep.subr.mxu0 0.0
  %1008 = vmatpush1.msra.mxu0 0.0
  %1009 = vmatprep.subr.mxu0 0.0
  %1010 = vmatpush1.msra.mxu0 0.0
  %1011 = vmatprep.subr.mxu0 0.0
  %1012 = vmatpush1.msra.mxu0 0.0
  %1013 = vmatprep.subr.mxu0 0.0
  %1014 = vmatpush1.msra.mxu0 0.0
  %1015 = vmatprep.subr.mxu0 0.0
  %1016 = vmatpush1.msra.mxu0 0.0
  %1017 = vmatprep.subr.mxu0 0.0
  %1018 = vmatpush1.msra.mxu0 0.0
  %1019 = vmatprep.subr.mxu0 0.0
  %1020 = vmatpush1.msra.mxu0 0.0
  %1021 = vmatprep.subr.mxu0 0.0
  %1022 = vmatpush1.msra.mxu0 0.0
  %1023 = vmatprep.subr.mxu0 0.0
  %1024 = vmatpush1.msra.mxu0 0.0
  %1025 = vmatprep.subr.mxu0 0.0
  %1026 = vmatpush1.msra.mxu0 0.0
  %1027 = vmatprep.subr.mxu0 0.0
  %1028 = vmatpush1.msra.mxu0 0.0
  %1029 = vmatprep.subr.mxu0 0.0
  %1030 = vmatpush1.msra.mxu0 0.0
  %1031 = vmatprep.subr.mxu0 0.0
  %1032 = vmatpush1.msra.mxu0 0.0
  %1033 = vmatprep.subr.mxu0 0.0
  %1034 = vmatpush1.msra.mxu0 0.0
  %1035 = vmatprep.subr.mxu0 0.0
  %1036 = vmatpush1.msra.mxu0 0.0
  %1037 = vmatprep.subr.mxu0 0.0
  %1038 = vmatpush1.msra.mxu0 0.0
  %1039 = vmatprep.subr.mxu0 0.0
  %1040 = vmatpush1.msra.mxu0 0.0
  %1041 = vmatprep.subr.mxu0 0.0
  %1042 = vmatpush1.msra.mxu0 0.0
  %1043 = vmatprep.subr.mxu0 0.0
  %1044 = vmatpush1.msra.mxu0 0.0
  %1045 = vmatprep.subr.mxu0 0.0
  %1046 = vmatpush1.msra.mxu0 0.0
  %1047 = vmatprep.subr.mxu0 0.0
  %1048 = vmatpush1.msra.mxu0 0.0
  %1049 = vmatprep.subr.mxu0 0.0
  %1050 = vmatpush1.msra.mxu0 0.0
  %1051 = vmatprep.subr.mxu0 0.0
  %1052 = vmatpush1.msra.mxu0 0.0
  %1053 = vmatprep.subr.mxu0 0.0
  %1054 = vmatpush1.msra.mxu0 0.0
  %1055 = vmatprep.subr.mxu0 0.0
  %1056 = vmatpush1.msra.mxu0 0.0
  %1057 = vmatprep.subr.mxu0 0.0
  %1058 = vmatpush1.msra.mxu0 0.0
  %1059 = vmatprep.subr.mxu0 0.0
  %1060 = vmatpush1.msra.mxu0 0.0
  %1061 = vmatprep.subr.mxu0 0.0
  %1062 = vmatpush1.msra.mxu0 0.0
  %1063 = vmatprep.mubr.f32.mxu0 0.0
  %1064 = vmatmul.mubr.f32.gmra.mrb[0].mxu0 %v997
  %v1065 = vpop.f32.mrb[0].mxu0
  %v1066 = vadd.f32 0.0, %v1065
  %v1067 = vpop.f32.mrb[0].mxu0
  %1068 = vdwg.mxu0
  %v1069 = vadd.f32 %v253, %v1066
  %v1070 = vxor.u32 %v1069, 2147483648
  %v1071 = vmul.f32 %v1070, 1.442695
  %v1072 = vpow.pop %v1071
  %v1073 = vadd.f32 %v1072, 1.0
  %v1074 = vrcp.pop %v1073
  %v1075 = vmul.f32 1.0, %v1074
  %v1076 = vmul.f32 %v1075, 2.0
  %v1077 = vsub.f32 %v1076, 1.0
  %v1078 = vmul.f32 %v1075, %v983
  %1080 = vrot.lane.b32.xlu0 %v1077, 64
  %v1081 = vpop.permute.xlu0 %1080
  %v1083 = vmul.f32 %v1075, %v1081
  %1085 = vrot.lane.b32.xlu0 %v1083, 32
  %v1086 = vpop.permute.xlu0 %1085
  %v1088 = vadd.f32 %v1078, %v1086
  %v1089 = vtanh.pop %v1088
  %1091 = vrot.lane.b32.xlu0 %v1089, 64
  %v1092 = vpop.permute.xlu0 %1091
  %v1094 = vmul.f32 %v1075, %v1092
  %1095 = vst.msk [vmem:[#allocation2 + $0x8] sm:$0xff] %vm679, %v1094
  %v1096 = vld [vmem:[#allocation2] sm:$0xff]
  %v1097 = vld [vmem:[#allocation2 + $0x8] sm:$0xff]
  %v1098 = vld [vmem:[%s6] sm:$0xff]
  %v1099 = vld [vmem:[%s6 + $0x8] sm:$0xff]
  %v1100 = vld [vmem:[%s6 + $0x10] sm:$0xff]
  %v1101 = vld [vmem:[%s6 + $0x18] sm:$0xff]
  %v1102 = vld [vmem:[%s6 + $0x20] sm:$0xff]
  %v1103 = vld [vmem:[%s6 + $0x28] sm:$0xff]
  %v1104 = vld [vmem:[%s6 + $0x30] sm:$0xff]
  %v1105 = vld [vmem:[%s6 + $0x38] sm:$0xff]
  %v1106 = vld [vmem:[%s6 + $0x40] sm:$0xff]
  %v1107 = vld [vmem:[%s6 + $0x48] sm:$0xff]
  %v1108 = vld [vmem:[%s6 + $0x50] sm:$0xff]
  %v1109 = vld [vmem:[%s6 + $0x58] sm:$0xff]
  %v1110 = vld [vmem:[%s6 + $0x60] sm:$0xff]
  %v1111 = vld [vmem:[%s6 + $0x68] sm:$0xff]
  %v1112 = vld [vmem:[%s6 + $0x70] sm:$0xff]
  %v1113 = vld [vmem:[%s6 + $0x78] sm:$0xff]
  %v1114 = vld [vmem:[%s6 + $0x80] sm:$0xff]
  %v1115 = vld [vmem:[%s6 + $0x88] sm:$0xff]
  %v1116 = vld [vmem:[%s6 + $0x90] sm:$0xff]
  %v1117 = vld [vmem:[%s6 + $0x98] sm:$0xff]
  %v1118 = vld [vmem:[%s6 + $0xa0] sm:$0xff]
  %v1119 = vld [vmem:[%s6 + $0xa8] sm:$0xff]
  %v1120 = vld [vmem:[%s6 + $0xb0] sm:$0xff]
  %v1121 = vld [vmem:[%s6 + $0xb8] sm:$0xff]
  %v1122 = vld [vmem:[%s6 + $0xc0] sm:$0xff]
  %v1123 = vld [vmem:[%s6 + $0xc8] sm:$0xff]
  %v1124 = vld [vmem:[%s6 + $0xd0] sm:$0xff]
  %v1125 = vld [vmem:[%s6 + $0xd8] sm:$0xff]
  %v1126 = vld [vmem:[%s6 + $0xe0] sm:$0xff]
  %v1127 = vld [vmem:[%s6 + $0xe8] sm:$0xff]
  %v1128 = vld [vmem:[%s6 + $0xf0] sm:$0xff]
  %v1129 = vld [vmem:[%s6 + $0xf8] sm:$0xff]
  %1130 = vmatprep.subr.mxu0 0.0
  %1131 = vmatpush1.msra.mxu0 %v1098
  %1132 = vmatprep.subr.mxu0 0.0
  %1133 = vmatpush1.msra.mxu0 %v1099
  %1134 = vmatprep.subr.mxu0 0.0
  %1135 = vmatpush1.msra.mxu0 %v1100
  %1136 = vmatprep.subr.mxu0 0.0
  %1137 = vmatpush1.msra.mxu0 %v1101
  %1138 = vmatprep.subr.mxu0 0.0
  %1139 = vmatpush1.msra.mxu0 %v1102
  %1140 = vmatprep.subr.mxu0 0.0
  %1141 = vmatpush1.msra.mxu0 %v1103
  %1142 = vmatprep.subr.mxu0 0.0
  %1143 = vmatpush1.msra.mxu0 %v1104
  %1144 = vmatprep.subr.mxu0 0.0
  %1145 = vmatpush1.msra.mxu0 %v1105
  %1146 = vmatprep.subr.mxu0 0.0
  %1147 = vmatpush1.msra.mxu0 %v1106
  %1148 = vmatprep.subr.mxu0 0.0
  %1149 = vmatpush1.msra.mxu0 %v1107
  %1150 = vmatprep.subr.mxu0 0.0
  %1151 = vmatpush1.msra.mxu0 %v1108
  %1152 = vmatprep.subr.mxu0 0.0
  %1153 = vmatpush1.msra.mxu0 %v1109
  %1154 = vmatprep.subr.mxu0 0.0
  %1155 = vmatpush1.msra.mxu0 %v1110
  %1156 = vmatprep.subr.mxu0 0.0
  %1157 = vmatpush1.msra.mxu0 %v1111
  %1158 = vmatprep.subr.mxu0 0.0
  %1159 = vmatpush1.msra.mxu0 %v1112
  %1160 = vmatprep.subr.mxu0 0.0
  %1161 = vmatpush1.msra.mxu0 %v1113
  %1162 = vmatprep.subr.mxu0 0.0
  %1163 = vmatpush1.msra.mxu0 %v1114
  %1164 = vmatprep.subr.mxu0 0.0
  %1165 = vmatpush1.msra.mxu0 %v1115
  %1166 = vmatprep.subr.mxu0 0.0
  %1167 = vmatpush1.msra.mxu0 %v1116
  %1168 = vmatprep.subr.mxu0 0.0
  %1169 = vmatpush1.msra.mxu0 %v1117
  %1170 = vmatprep.subr.mxu0 0.0
  %1171 = vmatpush1.msra.mxu0 %v1118
  %1172 = vmatprep.subr.mxu0 0.0
  %1173 = vmatpush1.msra.mxu0 %v1119
  %1174 = vmatprep.subr.mxu0 0.0
  %1175 = vmatpush1.msra.mxu0 %v1120
  %1176 = vmatprep.subr.mxu0 0.0
  %1177 = vmatpush1.msra.mxu0 %v1121
  %1178 = vmatprep.subr.mxu0 0.0
  %1179 = vmatpush1.msra.mxu0 %v1122
  %1180 = vmatprep.subr.mxu0 0.0
  %1181 = vmatpush1.msra.mxu0 %v1123
  %1182 = vmatprep.subr.mxu0 0.0
  %1183 = vmatpush1.msra.mxu0 %v1124
  %1184 = vmatprep.subr.mxu0 0.0
  %1185 = vmatpush1.msra.mxu0 %v1125
  %1186 = vmatprep.subr.mxu0 0.0
  %1187 = vmatpush1.msra.mxu0 %v1126
  %1188 = vmatprep.subr.mxu0 0.0
  %1189 = vmatpush1.msra.mxu0 %v1127
  %1190 = vmatprep.subr.mxu0 0.0
  %1191 = vmatpush1.msra.mxu0 %v1128
  %1192 = vmatprep.subr.mxu0 0.0
  %1193 = vmatpush1.msra.mxu0 %v1129
  %1194 = vmatprep.mubr.f32.mxu0 %v1097
  %1195 = vmatmul.mubr.f32.gmra.mrb[0].mxu0 %v1096
  %v1196 = vpop.f32.mrb[0].mxu0
  %v1197 = vadd.f32 0.0, %v1196
  %v1198 = vpop.f32.mrb[0].mxu0
  %1199 = vdwg.mxu0
  %vm1200 = vcmask 433152
  %v1202 = vsel %vm1200, %v256, 0
  %v1205 = vsel %vm39, %v263, 0
  %1207 = vmatprep.subr.mxu0 0.0
  %1208 = vmatpush1.msra.mxu0 %v257
  %1209 = vmatprep.subr.mxu0 0.0
  %1210 = vmatpush1.msra.mxu0 %v258
  %1211 = vmatprep.subr.mxu0 0.0
  %1212 = vmatpush1.msra.mxu0 %v259
  %1213 = vmatprep.subr.mxu0 0.0
  %1214 = vmatpush1.msra.mxu0 %v260
  %1215 = vmatprep.subr.mxu0 0.0
  %1216 = vmatpush1.msra.mxu0 %v261
  %1217 = vmatprep.subr.mxu0 0.0
  %1218 = vmatpush1.msra.mxu0 %v262
  %1219 = vmatprep.subr.mxu0 0.0
  %1220 = vmatpush1.msra.mxu0 %v1205
  %1221 = vmatprep.subr.mxu0 0.0
  %1222 = vmatpush1.msra.mxu0 0.0
  %1223 = vmatprep.subr.mxu0 0.0
  %1224 = vmatpush1.msra.mxu0 0.0
  %1225 = vmatprep.subr.mxu0 0.0
  %1226 = vmatpush1.msra.mxu0 0.0
  %1227 = vmatprep.subr.mxu0 0.0
  %1228 = vmatpush1.msra.mxu0 0.0
  %1229 = vmatprep.subr.mxu0 0.0
  %1230 = vmatpush1.msra.mxu0 0.0
  %1231 = vmatprep.subr.mxu0 0.0
  %1232 = vmatpush1.msra.mxu0 0.0
  %1233 = vmatprep.subr.mxu0 0.0
  %1234 = vmatpush1.msra.mxu0 0.0
  %1235 = vmatprep.subr.mxu0 0.0
  %1236 = vmatpush1.msra.mxu0 0.0
  %1237 = vmatprep.subr.mxu0 0.0
  %1238 = vmatpush1.msra.mxu0 0.0
  %1239 = vmatprep.subr.mxu0 0.0
  %1240 = vmatpush1.msra.mxu0 0.0
  %1241 = vmatprep.subr.mxu0 0.0
  %1242 = vmatpush1.msra.mxu0 0.0
  %1243 = vmatprep.subr.mxu0 0.0
  %1244 = vmatpush1.msra.mxu0 0.0
  %1245 = vmatprep.subr.mxu0 0.0
  %1246 = vmatpush1.msra.mxu0 0.0
  %1247 = vmatprep.subr.mxu0 0.0
  %1248 = vmatpush1.msra.mxu0 0.0
  %1249 = vmatprep.subr.mxu0 0.0
  %1250 = vmatpush1.msra.mxu0 0.0
  %1251 = vmatprep.subr.mxu0 0.0
  %1252 = vmatpush1.msra.mxu0 0.0
  %1253 = vmatprep.subr.mxu0 0.0
  %1254 = vmatpush1.msra.mxu0 0.0
  %1255 = vmatprep.subr.mxu0 0.0
  %1256 = vmatpush1.msra.mxu0 0.0
  %1257 = vmatprep.subr.mxu0 0.0
  %1258 = vmatpush1.msra.mxu0 0.0
  %1259 = vmatprep.subr.mxu0 0.0
  %1260 = vmatpush1.msra.mxu0 0.0
  %1261 = vmatprep.subr.mxu0 0.0
  %1262 = vmatpush1.msra.mxu0 0.0
  %1263 = vmatprep.subr.mxu0 0.0
  %1264 = vmatpush1.msra.mxu0 0.0
  %1265 = vmatprep.subr.mxu0 0.0
  %1266 = vmatpush1.msra.mxu0 0.0
  %1267 = vmatprep.subr.mxu0 0.0
  %1268 = vmatpush1.msra.mxu0 0.0
  %1269 = vmatprep.subr.mxu0 0.0
  %1270 = vmatpush1.msra.mxu0 0.0
  %1271 = vmatprep.mubr.f32.mxu0 0.0
  %1272 = vmatmul.mubr.f32.gmra.mrb[0].mxu0 %v1202
  %v1273 = vpop.f32.mrb[0].mxu0
  %v1274 = vadd.f32 %v1197, %v1273
  %v1275 = vpop.f32.mrb[0].mxu0
  %1276 = vdwg.mxu0
  %v1277 = vxor.u32 %v1274, 2147483648
  %v1278 = vmul.f32 %v1277, 1.442695
  %v1279 = vpow.pop %v1278
  %v1280 = vadd.f32 %v1279, 1.0
  %v1281 = vrcp.pop %v1280
  %v1282 = vmul.f32 1.0, %v1281
  %vm1283 = vcmask 7168
  %1284 = vst.msk [vmem:[%s8] sm:$0xff] %vm1283, %v1282
  // Predicated region
  $region34: #{tpu_custom_call.1} parent=0 // pred_check
    _
  $region35: #{tpu_custom_call.1} parent=0 // pred_check_branch
    %1286 = sbr.rel (0) target = $region37
  $region36: #{tpu_custom_call.1} parent=0 // pred_region
    _
  $region37: #{tpu_custom_call.1} parent=0 // pred_fallthru
    _
  // Predicated region
  $region38: #{tpu_custom_call.1} parent=0 // pred_check
    _
  $region39: #{tpu_custom_call.1} parent=0 // pred_check_branch
    %1288 = sbr.rel (0) target = $region41
  $region40: #{tpu_custom_call.1} parent=0 // pred_region
    _
  $region41: #{tpu_custom_call.1} parent=0 // pred_fallthru
    _

</llo_original>
